<compile_context>
chip_gen: v7x
topology: tpu7x:2x2x1
jax: 0.10.0
libtpu: 0.0.40
codegen_flags: <defaults>
</compile_context>

<pallas_src>
import functools

import jax
import jax.numpy as jnp
from jax.experimental import pallas as pl
from jax.experimental.pallas import tpu as pltpu


def cbam_kernel(wcols_ref, x_ref, w1_ref, w2_ref, o_ref, pad_ref,
                *, H, W, K, C, Bblk, base, pad_len):
    HW = H * W
    p = K // 2
    R = 2 * Bblk
    inv_hw = 1.0 / float(HW)
    inv_c = 1.0 / float(C)

    # ---------------- Channel attention ----------------
    # Per-image avg/max pooled channel vectors as (C, 1) columns; one fused MLP
    # over all 2*Bblk columns (two small MXU matmuls) instead of per-image GEMVs.
    cols_avg, cols_max = [], []
    for b in range(Bblk):
        xb = x_ref[b].astype(jnp.float32)                             # (C, HW)
        cols_avg.append(jnp.sum(xb, axis=1, keepdims=True) * inv_hw)  # (C, 1)
        cols_max.append(jnp.max(xb, axis=1, keepdims=True))           # (C, 1)
    pooled = jnp.concatenate(cols_avg + cols_max, axis=1)             # (C, 2*Bblk)

    w1 = w1_ref[...].astype(jnp.float32)                              # (hidden, C)
    w2 = w2_ref[...].astype(jnp.float32)                              # (C, hidden)
    hid = jnp.maximum(jnp.dot(w1, pooled, preferred_element_type=jnp.float32), 0.0)
    mlp = jnp.dot(w2, hid, preferred_element_type=jnp.float32)        # (C, 2*Bblk)
    feats_c = jax.nn.sigmoid(mlp[:, :Bblk] + mlp[:, Bblk:])           # (C, Bblk)

    # ---------------- Spatial attention ----------------
    # Scratch rows [0, Bblk) hold the channel-avg maps, rows [Bblk, 2*Bblk) the
    # channel-max maps, each as a flat zero-bordered padded map.  Only the
    # border strips are re-zeroed; the live region is fully overwritten below.
    # Runs every grid step (safe under megacore "parallel" sharding).
    if base > 0:
        pad_ref[:, :base] = jnp.zeros((R, base), jnp.float32)
    trail = pad_len - (base + HW)
    if trail > 0:
        pad_ref[:, base + HW:] = jnp.zeros((R, trail), jnp.float32)

    for b in range(Bblk):
        x_ca = x_ref[b].astype(jnp.float32) * feats_c[:, b:b + 1]     # (C, HW)
        avg_s = jnp.sum(x_ca, axis=0, keepdims=True) * inv_c          # (1, HW)
        max_s = jnp.max(x_ca, axis=0, keepdims=True)                  # (1, HW)
        pad_ref[b:b + 1, base:base + HW] = avg_s                      # 128-aligned store
        pad_ref[Bblk + b:Bblk + b + 1, base:base + HW] = max_s

    # KxK conv batched across all 2*Bblk sublane rows: each tap is one (R, HW)
    # slice times a per-row weight column; K-1 lane masks (from an in-kernel
    # iota, no mask input) zero the horizontally out-of-range taps.
    col = jax.lax.broadcasted_iota(jnp.int32, (1, HW), 1)
    col = jnp.bitwise_and(col, W - 1) if (W & (W - 1)) == 0 else col % W
    wcols = wcols_ref[...].astype(jnp.float32)                        # (R, K*K)

    conv2 = None
    for kx in range(K):
        dx = kx - p
        part = None
        for ky in range(K):
            t = ky * K + kx
            s0 = base + (ky - p) * W + dx
            term = pad_ref[:, s0:s0 + HW] * wcols[:, t:t + 1]         # (R, HW)
            part = term if part is None else part + term
        if dx != 0:
            part = jnp.where((col + dx >= 0) & (col + dx < W), part, 0.0)
        conv2 = part if conv2 is None else conv2 + part
    conv = conv2[:Bblk] + conv2[Bblk:]                                # avg rows + max rows
    feats_s = jax.nn.sigmoid(conv)                                    # (Bblk, HW)

    # ---------------- Gate & store ----------------
    # Recompute the cheap channel gate from the VMEM-resident block instead of
    # keeping Bblk f32 copies live across the conv.
    for b in range(Bblk):
        x_ca = x_ref[b].astype(jnp.float32) * feats_c[:, b:b + 1]
        o_ref[b] = (x_ca * feats_s[b:b + 1, :]).astype(o_ref.dtype)


def _round_up(v, m):
    return (v + m - 1) // m * m


def _vmem_capacity_bytes():
    """Per-core VMEM capacity, with a conservative (v7x, 64 MiB) fallback."""
    try:
        cap = getattr(pltpu.get_tpu_info(), "vmem_capacity_bytes", None)
        if cap:
            return int(cap)
    except Exception:
        pass
    return 64 << 20


def _pick_bblk(B, C, HW, pad_len, itemsize, budget):
    """Largest batch block whose f32-aware working set fits `budget`, keeping
    >= 2 grid steps when possible (so both v7x TensorCores get work)."""
    def fits(d):
        io = 4 * d * C * HW * itemsize        # double-buffered in + out blocks
        f32_img = 2 * C * HW * 4              # per-image f32 temps (xb, x_ca)
        conv = 6 * 2 * d * HW * 4             # tap/partial/acc/feats_s working set
        scr = 2 * d * pad_len * 4             # padded pooled-map scratch
        return io + f32_img + conv + scr <= budget

    divs = [d for d in range(1, min(B, 32) + 1) if B % d == 0 and fits(d)]
    if not divs:
        return 1
    pref = [d for d in divs if B // d >= 2]
    return max(pref) if pref else max(divs)


def cbam_pallas(x, w1, w2, wconv, kernel_size=7):
    B, C, H, W = x.shape
    HW = H * W
    hidden = w1.shape[0]
    K = kernel_size
    p = K // 2
    assert w1.shape == (hidden, C) and w2.shape == (C, hidden)
    assert wconv.shape == (2, K, K)
    itemsize = jnp.dtype(x.dtype).itemsize

    # Lane-dense layout: (B, C, H*W) — free row-major reshape outside the kernel.
    x_flat = x.reshape(B, C, HW)

    # Flat padded-map geometry: the live region starts at a 128-aligned offset
    # so pooled-map stores are dense; leading/trailing zero strips absorb the
    # vertical out-of-range taps.
    base = _round_up(p * W + p, 128)
    pad_len = _round_up(base + HW + p * W + p, 128)

    cap = _vmem_capacity_bytes()
    budget = min(int(0.375 * cap), 48 << 20)   # ~24 MiB on v7x, ~48 MiB on v5e/v6e
    Bblk = _pick_bblk(B, C, HW, pad_len, itemsize, budget)
    R = 2 * Bblk
    grid = (B // Bblk,)

    # Per-row conv-tap weight columns: rows [0, Bblk) use the avg-channel
    # weights, rows [Bblk, 2*Bblk) the max-channel weights.
    wcols = jnp.repeat(wconv.reshape(2, K * K).astype(jnp.float32), Bblk, axis=0)

    block_bytes = Bblk * C * HW * itemsize
    scratch_bytes = R * pad_len * 4
    weight_bytes = (2 * C * hidden + R * K * K) * 4
    work_bytes = 2 * C * HW * 4 + 6 * R * HW * 4
    needed = 4 * block_bytes + scratch_bytes + 2 * weight_bytes + work_bytes + (2 << 20)
    vmem_limit = int(min(int(0.75 * cap), max(32 << 20, 2 * needed)))

    cost = pl.CostEstimate(
        flops=int(B * C * HW * 8 + 4 * B * K * K * HW + 8 * B * C * hidden),
        transcendentals=int(B * (C + HW)),
        bytes_accessed=int(2 * B * C * HW * itemsize + 2 * weight_bytes),
    )

    kernel = functools.partial(cbam_kernel, H=H, W=W, K=K, C=C, Bblk=Bblk,
                               base=base, pad_len=pad_len)
    out_flat = pl.pallas_call(
        kernel,
        out_shape=jax.ShapeDtypeStruct((B, C, HW), x.dtype),
        grid=grid,
        in_specs=[
            pl.BlockSpec((R, K * K), lambda b: (0, 0)),           # per-row conv weights
            pl.BlockSpec((Bblk, C, HW), lambda b: (b, 0, 0)),     # x (lane-dense)
            pl.BlockSpec((hidden, C), lambda b: (0, 0)),          # w1
            pl.BlockSpec((C, hidden), lambda b: (0, 0)),          # w2
        ],
        out_specs=pl.BlockSpec((Bblk, C, HW), lambda b: (b, 0, 0)),
        scratch_shapes=[
            pltpu.VMEM((R, pad_len), jnp.float32),                # padded pooled maps
        ],
        compiler_params=pltpu.CompilerParams(
            dimension_semantics=("parallel",),
            vmem_limit_bytes=vmem_limit),
        cost_estimate=cost,
    )(wcols, x_flat, w1, w2)
    return out_flat.reshape(B, C, H, W)


def cbam_reference(x, w1, w2, wconv):
    """Pure-JAX reference mirroring the PyTorch module exactly."""
    avg = jnp.mean(x, axis=(2, 3))                     # (B, C)
    mx = jnp.max(x, axis=(2, 3))                       # (B, C)

    def mlp(v):
        return jnp.maximum(v @ w1.T, 0.0) @ w2.T

    fc = jax.nn.sigmoid(mlp(avg) + mlp(mx))[:, :, None, None]
    xc = x * fc
    avg_s = jnp.mean(xc, axis=1, keepdims=True)
    max_s = jnp.max(xc, axis=1, keepdims=True)
    f = jnp.concatenate([avg_s, max_s], axis=1)        # (B, 2, H, W)
    conv = jax.lax.conv_general_dilated(
        f, wconv[None], window_strides=(1, 1), padding="SAME",
        dimension_numbers=("NCHW", "OIHW", "NCHW"))
    return xc * jax.nn.sigmoid(conv)


if __name__ == "__main__":
    B, C, H, W = 2, 16, 16, 16
    ratio, K = 8, 7
    hidden = C // ratio

    key = jax.random.PRNGKey(0)
    kx_, k1, k2, kc = jax.random.split(key, 4)
    x = jax.random.normal(kx_, (B, C, H, W), dtype=jnp.float32)
    # deterministic synthetic weights (PyTorch Linear / Conv2d layouts)
    w1 = jax.random.normal(k1, (hidden, C), dtype=jnp.float32) * 0.2   # Linear(C -> hidden)
    w2 = jax.random.normal(k2, (C, hidden), dtype=jnp.float32) * 0.2   # Linear(hidden -> C)
    wconv = jax.random.normal(kc, (2, K, K), dtype=jnp.float32) * 0.1  # Conv2d(2 -> 1, K, bias=False)

    out = cbam_pallas(x, w1, w2, wconv, kernel_size=K)
    out = jax.block_until_ready(out)

    ref = cbam_reference(x, w1, w2, wconv)
    assert out.shape == ref.shape and out.dtype == ref.dtype
    err = float(jnp.max(jnp.abs(out - ref)))
    assert jnp.allclose(out, ref, rtol=1e-4, atol=1e-4), err
    print("KERNEL_OK")
</pallas_src>

<mosaic_0001>
module attributes {stable_mosaic.version = 11 : i64} {
  func.func @cbam_kernel(%arg0: i32, %arg1: memref<2x49xf32, #tpu.memory_space<vmem>>, %arg2: memref<1x16x256xf32, #tpu.memory_space<vmem>>, %arg3: memref<2x16xf32, #tpu.memory_space<vmem>>, %arg4: memref<16x2xf32, #tpu.memory_space<vmem>>, %arg5: memref<1x16x256xf32, #tpu.memory_space<vmem>>, %arg6: memref<2x512xf32, #tpu.memory_space<vmem>>) attributes {dimension_semantics = [#tpu.dimension_semantics<parallel>], iteration_bounds = array<i64: 2>, scalar_prefetch = 0 : i64, scratch_operands = 1 : i64, tpu.core_type = #tpu.core_type<tc>, window_params = [{pipeline_mode = #tpu.pipeline_mode<synchronous>, transform_indices = @transform_0, window_bounds = array<i64: 2, 49>}, {transform_indices = @transform_1, window_bounds = array<i64: 1, 16, 256>}, {pipeline_mode = #tpu.pipeline_mode<synchronous>, transform_indices = @transform_2, window_bounds = array<i64: 2, 16>}, {pipeline_mode = #tpu.pipeline_mode<synchronous>, transform_indices = @transform_3, window_bounds = array<i64: 16, 2>}, {transform_indices = @transform_4, window_bounds = array<i64: 1, 16, 256>}]} {
    %c0 = arith.constant 0 : index
    %c0_0 = arith.constant 0 : index
    %c0_1 = arith.constant 0 : index
    %0 = vector.load %arg2[%c0, %c0_0, %c0_1] : memref<1x16x256xf32, #tpu.memory_space<vmem>>, vector<1x16x256xf32>
    %1 = vector.shape_cast %0 : vector<1x16x256xf32> to vector<16x256xf32>
    %cst = arith.constant dense<0.000000e+00> : vector<16xf32>
    %2 = vector.multi_reduction <add>, %1, %cst [1] : vector<16x256xf32> to vector<16xf32>
    %3 = vector.shape_cast %2 : vector<16xf32> to vector<16x1xf32>
    %cst_2 = arith.constant 3.906250e-03 : f32
    %4 = vector.broadcast %cst_2 : f32 to vector<16x1xf32>
    %5 = arith.mulf %3, %4 : vector<16x1xf32>
    %cst_3 = arith.constant dense<0xFF800000> : vector<16xf32>
    %6 = vector.multi_reduction <maximumf>, %1, %cst_3 [1] : vector<16x256xf32> to vector<16xf32>
    %7 = vector.shape_cast %6 : vector<16xf32> to vector<16x1xf32>
    %8 = tpu.concatenate %5, %7 in 1 : vector<16x1xf32>, vector<16x1xf32> -> vector<16x2xf32>
    %c0_4 = arith.constant 0 : index
    %c0_5 = arith.constant 0 : index
    %9 = vector.load %arg3[%c0_4, %c0_5] : memref<2x16xf32, #tpu.memory_space<vmem>>, vector<2x16xf32>
    %c0_6 = arith.constant 0 : index
    %c0_7 = arith.constant 0 : index
    %10 = vector.load %arg4[%c0_6, %c0_7] : memref<16x2xf32, #tpu.memory_space<vmem>>, vector<16x2xf32>
    %cst_8 = arith.constant dense<0.000000e+00> : vector<2x2xf32>
    %11 = tpu.matmul %9, %8, %cst_8 {dimension_numbers = #tpu.dot_dimension_numbers<[1], [0], [0], [1], [0, 0, 1, 1], [], []>} : vector<2x16xf32>, vector<16x2xf32>, vector<2x2xf32> -> vector<2x2xf32>
    %cst_9 = arith.constant 0.000000e+00 : f32
    %12 = vector.broadcast %cst_9 : f32 to vector<2x2xf32>
    %13 = arith.maximumf %11, %12 : vector<2x2xf32>
    %cst_10 = arith.constant dense<0.000000e+00> : vector<16x2xf32>
    %14 = tpu.matmul %10, %13, %cst_10 {dimension_numbers = #tpu.dot_dimension_numbers<[1], [0], [0], [1], [0, 0, 1, 1], [], []>} : vector<16x2xf32>, vector<2x2xf32>, vector<16x2xf32> -> vector<16x2xf32>
    %15 = vector.extract_strided_slice %14 {offsets = [0, 0], sizes = [16, 1], strides = [1, 1]} : vector<16x2xf32> to vector<16x1xf32>
    %16 = vector.extract_strided_slice %14 {offsets = [0, 1], sizes = [16, 1], strides = [1, 1]} : vector<16x2xf32> to vector<16x1xf32>
    %17 = arith.addf %15, %16 : vector<16x1xf32>
    %18 = arith.negf %17 : vector<16x1xf32>
    %19 = math.exp %18 : vector<16x1xf32>
    %cst_11 = arith.constant 1.000000e+00 : f32
    %20 = vector.broadcast %cst_11 : f32 to vector<16x1xf32>
    %21 = arith.addf %20, %19 : vector<16x1xf32>
    %22 = arith.divf %20, %21 : vector<16x1xf32>
    %cst_12 = arith.constant 0.000000e+00 : f32
    %23 = vector.broadcast %cst_12 : f32 to vector<2x128xf32>
    %c0_13 = arith.constant 0 : index
    %c0_14 = arith.constant 0 : index
    %24 = vector.load %arg6[%c0_13, %c0_14] : memref<2x512xf32, #tpu.memory_space<vmem>>, vector<2x128xf32>
    tpu.vector_store %arg6[%c0_13, %c0_14], %23 {strides = array<i32>} : memref<2x512xf32, #tpu.memory_space<vmem>>, vector<2x128xf32>,
    %cst_15 = arith.constant 0.000000e+00 : f32
    %25 = vector.broadcast %cst_15 : f32 to vector<2x128xf32>
    %c0_16 = arith.constant 0 : index
    %c384 = arith.constant 384 : index
    %26 = vector.load %arg6[%c0_16, %c384] : memref<2x512xf32, #tpu.memory_space<vmem>>, vector<2x128xf32>
    tpu.vector_store %arg6[%c0_16, %c384], %25 {strides = array<i32>} : memref<2x512xf32, #tpu.memory_space<vmem>>, vector<2x128xf32>,
    %c0_17 = arith.constant 0 : index
    %c0_18 = arith.constant 0 : index
    %c0_19 = arith.constant 0 : index
    %27 = vector.load %arg2[%c0_17, %c0_18, %c0_19] : memref<1x16x256xf32, #tpu.memory_space<vmem>>, vector<1x16x256xf32>
    %28 = vector.shape_cast %27 : vector<1x16x256xf32> to vector<16x256xf32>
    %29 = vector.broadcast %22 : vector<16x1xf32> to vector<16x256xf32>
    %30 = arith.mulf %28, %29 : vector<16x256xf32>
    %cst_20 = arith.constant dense<0.000000e+00> : vector<256xf32>
    %31 = vector.multi_reduction <add>, %30, %cst_20 [0] : vector<16x256xf32> to vector<256xf32>
    %32 = vector.shape_cast %31 : vector<256xf32> to vector<1x256xf32>
    %cst_21 = arith.constant 6.250000e-02 : f32
    %33 = vector.broadcast %cst_21 : f32 to vector<1x256xf32>
    %34 = arith.mulf %32, %33 : vector<1x256xf32>
    %cst_22 = arith.constant dense<0xFF800000> : vector<256xf32>
    %35 = vector.multi_reduction <maximumf>, %30, %cst_22 [0] : vector<16x256xf32> to vector<256xf32>
    %36 = vector.shape_cast %35 : vector<256xf32> to vector<1x256xf32>
    %c0_23 = arith.constant 0 : index
    %c128 = arith.constant 128 : index
    %37 = vector.load %arg6[%c0_23, %c128] : memref<2x512xf32, #tpu.memory_space<vmem>>, vector<1x256xf32>
    tpu.vector_store %arg6[%c0_23, %c128], %34 {strides = array<i32>} : memref<2x512xf32, #tpu.memory_space<vmem>>, vector<1x256xf32>,
    %c1 = arith.constant 1 : index
    %c128_24 = arith.constant 128 : index
    %38 = vector.load %arg6[%c1, %c128_24] : memref<2x512xf32, #tpu.memory_space<vmem>>, vector<1x256xf32>
    tpu.vector_store %arg6[%c1, %c128_24], %36 {strides = array<i32>} : memref<2x512xf32, #tpu.memory_space<vmem>>, vector<1x256xf32>,
    %39 = tpu.iota {dimensions = array<i32: 1>} : vector<1x256xi32>
    %c15_i32 = arith.constant 15 : i32
    %40 = vector.broadcast %c15_i32 : i32 to vector<1x256xi32>
    %41 = arith.andi %39, %40 : vector<1x256xi32>
    %c0_25 = arith.constant 0 : index
    %c0_26 = arith.constant 0 : index
    %42 = vector.load %arg1[%c0_25, %c0_26] : memref<2x49xf32, #tpu.memory_space<vmem>>, vector<2x49xf32>
    %c0_27 = arith.constant 0 : index
    %c77 = arith.constant 77 : index
    %43 = vector.load %arg6[%c0_27, %c77] : memref<2x512xf32, #tpu.memory_space<vmem>>, vector<2x256xf32>
    %44 = vector.extract_strided_slice %42 {offsets = [0, 0], sizes = [2, 1], strides = [1, 1]} : vector<2x49xf32> to vector<2x1xf32>
    %45 = vector.broadcast %44 : vector<2x1xf32> to vector<2x256xf32>
    %46 = arith.mulf %43, %45 : vector<2x256xf32>
    %c0_28 = arith.constant 0 : index
    %c93 = arith.constant 93 : index
    %47 = vector.load %arg6[%c0_28, %c93] : memref<2x512xf32, #tpu.memory_space<vmem>>, vector<2x256xf32>
    %48 = vector.extract_strided_slice %42 {offsets = [0, 7], sizes = [2, 1], strides = [1, 1]} : vector<2x49xf32> to vector<2x1xf32>
    %49 = vector.broadcast %48 : vector<2x1xf32> to vector<2x256xf32>
    %50 = arith.mulf %47, %49 : vector<2x256xf32>
    %51 = arith.addf %46, %50 : vector<2x256xf32>
    %c0_29 = arith.constant 0 : index
    %c109 = arith.constant 109 : index
    %52 = vector.load %arg6[%c0_29, %c109] : memref<2x512xf32, #tpu.memory_space<vmem>>, vector<2x256xf32>
    %53 = vector.extract_strided_slice %42 {offsets = [0, 14], sizes = [2, 1], strides = [1, 1]} : vector<2x49xf32> to vector<2x1xf32>
    %54 = vector.broadcast %53 : vector<2x1xf32> to vector<2x256xf32>
    %55 = arith.mulf %52, %54 : vector<2x256xf32>
    %56 = arith.addf %51, %55 : vector<2x256xf32>
    %c0_30 = arith.constant 0 : index
    %c125 = arith.constant 125 : index
    %57 = vector.load %arg6[%c0_30, %c125] : memref<2x512xf32, #tpu.memory_space<vmem>>, vector<2x256xf32>
    %58 = vector.extract_strided_slice %42 {offsets = [0, 21], sizes = [2, 1], strides = [1, 1]} : vector<2x49xf32> to vector<2x1xf32>
    %59 = vector.broadcast %58 : vector<2x1xf32> to vector<2x256xf32>
    %60 = arith.mulf %57, %59 : vector<2x256xf32>
    %61 = arith.addf %56, %60 : vector<2x256xf32>
    %c0_31 = arith.constant 0 : index
    %c141 = arith.constant 141 : index
    %62 = vector.load %arg6[%c0_31, %c141] : memref<2x512xf32, #tpu.memory_space<vmem>>, vector<2x256xf32>
    %63 = vector.extract_strided_slice %42 {offsets = [0, 28], sizes = [2, 1], strides = [1, 1]} : vector<2x49xf32> to vector<2x1xf32>
    %64 = vector.broadcast %63 : vector<2x1xf32> to vector<2x256xf32>
    %65 = arith.mulf %62, %64 : vector<2x256xf32>
    %66 = arith.addf %61, %65 : vector<2x256xf32>
    %c0_32 = arith.constant 0 : index
    %c157 = arith.constant 157 : index
    %67 = vector.load %arg6[%c0_32, %c157] : memref<2x512xf32, #tpu.memory_space<vmem>>, vector<2x256xf32>
    %68 = vector.extract_strided_slice %42 {offsets = [0, 35], sizes = [2, 1], strides = [1, 1]} : vector<2x49xf32> to vector<2x1xf32>
    %69 = vector.broadcast %68 : vector<2x1xf32> to vector<2x256xf32>
    %70 = arith.mulf %67, %69 : vector<2x256xf32>
    %71 = arith.addf %66, %70 : vector<2x256xf32>
    %c0_33 = arith.constant 0 : index
    %c173 = arith.constant 173 : index
    %72 = vector.load %arg6[%c0_33, %c173] : memref<2x512xf32, #tpu.memory_space<vmem>>, vector<2x256xf32>
    %73 = vector.extract_strided_slice %42 {offsets = [0, 42], sizes = [2, 1], strides = [1, 1]} : vector<2x49xf32> to vector<2x1xf32>
    %74 = vector.broadcast %73 : vector<2x1xf32> to vector<2x256xf32>
    %75 = arith.mulf %72, %74 : vector<2x256xf32>
    %76 = arith.addf %71, %75 : vector<2x256xf32>
    %c-3_i32 = arith.constant -3 : i32
    %77 = vector.broadcast %c-3_i32 : i32 to vector<1x256xi32>
    %78 = arith.addi %41, %77 : vector<1x256xi32>
    %c0_i32 = arith.constant 0 : i32
    %79 = vector.broadcast %c0_i32 : i32 to vector<1x256xi32>
    %80 = arith.cmpi sge, %78, %79 : vector<1x256xi32>
    %c-3_i32_34 = arith.constant -3 : i32
    %81 = vector.broadcast %c-3_i32_34 : i32 to vector<1x256xi32>
    %82 = arith.addi %41, %81 : vector<1x256xi32>
    %c16_i32 = arith.constant 16 : i32
    %83 = vector.broadcast %c16_i32 : i32 to vector<1x256xi32>
    %84 = arith.cmpi slt, %82, %83 : vector<1x256xi32>
    %85 = arith.andi %80, %84 : vector<1x256xi1>
    %cst_35 = arith.constant 0.000000e+00 : f32
    %86 = vector.shape_cast %85 : vector<1x256xi1> to vector<1x256xi1>
    %87 = vector.broadcast %86 : vector<1x256xi1> to vector<2x256xi1>
    %88 = vector.broadcast %cst_35 : f32 to vector<2x256xf32>
    %89 = arith.select %87, %76, %88 : vector<2x256xi1>, vector<2x256xf32>
    %c0_36 = arith.constant 0 : index
    %c78 = arith.constant 78 : index
    %90 = vector.load %arg6[%c0_36, %c78] : memref<2x512xf32, #tpu.memory_space<vmem>>, vector<2x256xf32>
    %91 = vector.extract_strided_slice %42 {offsets = [0, 1], sizes = [2, 1], strides = [1, 1]} : vector<2x49xf32> to vector<2x1xf32>
    %92 = vector.broadcast %91 : vector<2x1xf32> to vector<2x256xf32>
    %93 = arith.mulf %90, %92 : vector<2x256xf32>
    %c0_37 = arith.constant 0 : index
    %c94 = arith.constant 94 : index
    %94 = vector.load %arg6[%c0_37, %c94] : memref<2x512xf32, #tpu.memory_space<vmem>>, vector<2x256xf32>
    %95 = vector.extract_strided_slice %42 {offsets = [0, 8], sizes = [2, 1], strides = [1, 1]} : vector<2x49xf32> to vector<2x1xf32>
    %96 = vector.broadcast %95 : vector<2x1xf32> to vector<2x256xf32>
    %97 = arith.mulf %94, %96 : vector<2x256xf32>
    %98 = arith.addf %93, %97 : vector<2x256xf32>
    %c0_38 = arith.constant 0 : index
    %c110 = arith.constant 110 : index
    %99 = vector.load %arg6[%c0_38, %c110] : memref<2x512xf32, #tpu.memory_space<vmem>>, vector<2x256xf32>
    %100 = vector.extract_strided_slice %42 {offsets = [0, 15], sizes = [2, 1], strides = [1, 1]} : vector<2x49xf32> to vector<2x1xf32>
    %101 = vector.broadcast %100 : vector<2x1xf32> to vector<2x256xf32>
    %102 = arith.mulf %99, %101 : vector<2x256xf32>
    %103 = arith.addf %98, %102 : vector<2x256xf32>
    %c0_39 = arith.constant 0 : index
    %c126 = arith.constant 126 : index
    %104 = vector.load %arg6[%c0_39, %c126] : memref<2x512xf32, #tpu.memory_space<vmem>>, vector<2x256xf32>
    %105 = vector.extract_strided_slice %42 {offsets = [0, 22], sizes = [2, 1], strides = [1, 1]} : vector<2x49xf32> to vector<2x1xf32>
    %106 = vector.broadcast %105 : vector<2x1xf32> to vector<2x256xf32>
    %107 = arith.mulf %104, %106 : vector<2x256xf32>
    %108 = arith.addf %103, %107 : vector<2x256xf32>
    %c0_40 = arith.constant 0 : index
    %c142 = arith.constant 142 : index
    %109 = vector.load %arg6[%c0_40, %c142] : memref<2x512xf32, #tpu.memory_space<vmem>>, vector<2x256xf32>
    %110 = vector.extract_strided_slice %42 {offsets = [0, 29], sizes = [2, 1], strides = [1, 1]} : vector<2x49xf32> to vector<2x1xf32>
    %111 = vector.broadcast %110 : vector<2x1xf32> to vector<2x256xf32>
    %112 = arith.mulf %109, %111 : vector<2x256xf32>
    %113 = arith.addf %108, %112 : vector<2x256xf32>
    %c0_41 = arith.constant 0 : index
    %c158 = arith.constant 158 : index
    %114 = vector.load %arg6[%c0_41, %c158] : memref<2x512xf32, #tpu.memory_space<vmem>>, vector<2x256xf32>
    %115 = vector.extract_strided_slice %42 {offsets = [0, 36], sizes = [2, 1], strides = [1, 1]} : vector<2x49xf32> to vector<2x1xf32>
    %116 = vector.broadcast %115 : vector<2x1xf32> to vector<2x256xf32>
    %117 = arith.mulf %114, %116 : vector<2x256xf32>
    %118 = arith.addf %113, %117 : vector<2x256xf32>
    %c0_42 = arith.constant 0 : index
    %c174 = arith.constant 174 : index
    %119 = vector.load %arg6[%c0_42, %c174] : memref<2x512xf32, #tpu.memory_space<vmem>>, vector<2x256xf32>
    %120 = vector.extract_strided_slice %42 {offsets = [0, 43], sizes = [2, 1], strides = [1, 1]} : vector<2x49xf32> to vector<2x1xf32>
    %121 = vector.broadcast %120 : vector<2x1xf32> to vector<2x256xf32>
    %122 = arith.mulf %119, %121 : vector<2x256xf32>
    %123 = arith.addf %118, %122 : vector<2x256xf32>
    %c-2_i32 = arith.constant -2 : i32
    %124 = vector.broadcast %c-2_i32 : i32 to vector<1x256xi32>
    %125 = arith.addi %41, %124 : vector<1x256xi32>
    %c0_i32_43 = arith.constant 0 : i32
    %126 = vector.broadcast %c0_i32_43 : i32 to vector<1x256xi32>
    %127 = arith.cmpi sge, %125, %126 : vector<1x256xi32>
    %c-2_i32_44 = arith.constant -2 : i32
    %128 = vector.broadcast %c-2_i32_44 : i32 to vector<1x256xi32>
    %129 = arith.addi %41, %128 : vector<1x256xi32>
    %c16_i32_45 = arith.constant 16 : i32
    %130 = vector.broadcast %c16_i32_45 : i32 to vector<1x256xi32>
    %131 = arith.cmpi slt, %129, %130 : vector<1x256xi32>
    %132 = arith.andi %127, %131 : vector<1x256xi1>
    %cst_46 = arith.constant 0.000000e+00 : f32
    %133 = vector.shape_cast %132 : vector<1x256xi1> to vector<1x256xi1>
    %134 = vector.broadcast %133 : vector<1x256xi1> to vector<2x256xi1>
    %135 = vector.broadcast %cst_46 : f32 to vector<2x256xf32>
    %136 = arith.select %134, %123, %135 : vector<2x256xi1>, vector<2x256xf32>
    %137 = arith.addf %89, %136 : vector<2x256xf32>
    %c0_47 = arith.constant 0 : index
    %c79 = arith.constant 79 : index
    %138 = vector.load %arg6[%c0_47, %c79] : memref<2x512xf32, #tpu.memory_space<vmem>>, vector<2x256xf32>
    %139 = vector.extract_strided_slice %42 {offsets = [0, 2], sizes = [2, 1], strides = [1, 1]} : vector<2x49xf32> to vector<2x1xf32>
    %140 = vector.broadcast %139 : vector<2x1xf32> to vector<2x256xf32>
    %141 = arith.mulf %138, %140 : vector<2x256xf32>
    %c0_48 = arith.constant 0 : index
    %c95 = arith.constant 95 : index
    %142 = vector.load %arg6[%c0_48, %c95] : memref<2x512xf32, #tpu.memory_space<vmem>>, vector<2x256xf32>
    %143 = vector.extract_strided_slice %42 {offsets = [0, 9], sizes = [2, 1], strides = [1, 1]} : vector<2x49xf32> to vector<2x1xf32>
    %144 = vector.broadcast %143 : vector<2x1xf32> to vector<2x256xf32>
    %145 = arith.mulf %142, %144 : vector<2x256xf32>
    %146 = arith.addf %141, %145 : vector<2x256xf32>
    %c0_49 = arith.constant 0 : index
    %c111 = arith.constant 111 : index
    %147 = vector.load %arg6[%c0_49, %c111] : memref<2x512xf32, #tpu.memory_space<vmem>>, vector<2x256xf32>
    %148 = vector.extract_strided_slice %42 {offsets = [0, 16], sizes = [2, 1], strides = [1, 1]} : vector<2x49xf32> to vector<2x1xf32>
    %149 = vector.broadcast %148 : vector<2x1xf32> to vector<2x256xf32>
    %150 = arith.mulf %147, %149 : vector<2x256xf32>
    %151 = arith.addf %146, %150 : vector<2x256xf32>
    %c0_50 = arith.constant 0 : index
    %c127 = arith.constant 127 : index
    %152 = vector.load %arg6[%c0_50, %c127] : memref<2x512xf32, #tpu.memory_space<vmem>>, vector<2x256xf32>
    %153 = vector.extract_strided_slice %42 {offsets = [0, 23], sizes = [2, 1], strides = [1, 1]} : vector<2x49xf32> to vector<2x1xf32>
    %154 = vector.broadcast %153 : vector<2x1xf32> to vector<2x256xf32>
    %155 = arith.mulf %152, %154 : vector<2x256xf32>
    %156 = arith.addf %151, %155 : vector<2x256xf32>
    %c0_51 = arith.constant 0 : index
    %c143 = arith.constant 143 : index
    %157 = vector.load %arg6[%c0_51, %c143] : memref<2x512xf32, #tpu.memory_space<vmem>>, vector<2x256xf32>
    %158 = vector.extract_strided_slice %42 {offsets = [0, 30], sizes = [2, 1], strides = [1, 1]} : vector<2x49xf32> to vector<2x1xf32>
    %159 = vector.broadcast %158 : vector<2x1xf32> to vector<2x256xf32>
    %160 = arith.mulf %157, %159 : vector<2x256xf32>
    %161 = arith.addf %156, %160 : vector<2x256xf32>
    %c0_52 = arith.constant 0 : index
    %c159 = arith.constant 159 : index
    %162 = vector.load %arg6[%c0_52, %c159] : memref<2x512xf32, #tpu.memory_space<vmem>>, vector<2x256xf32>
    %163 = vector.extract_strided_slice %42 {offsets = [0, 37], sizes = [2, 1], strides = [1, 1]} : vector<2x49xf32> to vector<2x1xf32>
    %164 = vector.broadcast %163 : vector<2x1xf32> to vector<2x256xf32>
    %165 = arith.mulf %162, %164 : vector<2x256xf32>
    %166 = arith.addf %161, %165 : vector<2x256xf32>
    %c0_53 = arith.constant 0 : index
    %c175 = arith.constant 175 : index
    %167 = vector.load %arg6[%c0_53, %c175] : memref<2x512xf32, #tpu.memory_space<vmem>>, vector<2x256xf32>
    %168 = vector.extract_strided_slice %42 {offsets = [0, 44], sizes = [2, 1], strides = [1, 1]} : vector<2x49xf32> to vector<2x1xf32>
    %169 = vector.broadcast %168 : vector<2x1xf32> to vector<2x256xf32>
    %170 = arith.mulf %167, %169 : vector<2x256xf32>
    %171 = arith.addf %166, %170 : vector<2x256xf32>
    %c-1_i32 = arith.constant -1 : i32
    %172 = vector.broadcast %c-1_i32 : i32 to vector<1x256xi32>
    %173 = arith.addi %41, %172 : vector<1x256xi32>
    %c0_i32_54 = arith.constant 0 : i32
    %174 = vector.broadcast %c0_i32_54 : i32 to vector<1x256xi32>
    %175 = arith.cmpi sge, %173, %174 : vector<1x256xi32>
    %c-1_i32_55 = arith.constant -1 : i32
    %176 = vector.broadcast %c-1_i32_55 : i32 to vector<1x256xi32>
    %177 = arith.addi %41, %176 : vector<1x256xi32>
    %c16_i32_56 = arith.constant 16 : i32
    %178 = vector.broadcast %c16_i32_56 : i32 to vector<1x256xi32>
    %179 = arith.cmpi slt, %177, %178 : vector<1x256xi32>
    %180 = arith.andi %175, %179 : vector<1x256xi1>
    %cst_57 = arith.constant 0.000000e+00 : f32
    %181 = vector.shape_cast %180 : vector<1x256xi1> to vector<1x256xi1>
    %182 = vector.broadcast %181 : vector<1x256xi1> to vector<2x256xi1>
    %183 = vector.broadcast %cst_57 : f32 to vector<2x256xf32>
    %184 = arith.select %182, %171, %183 : vector<2x256xi1>, vector<2x256xf32>
    %185 = arith.addf %137, %184 : vector<2x256xf32>
    %c0_58 = arith.constant 0 : index
    %c80 = arith.constant 80 : index
    %186 = vector.load %arg6[%c0_58, %c80] : memref<2x512xf32, #tpu.memory_space<vmem>>, vector<2x256xf32>
    %187 = vector.extract_strided_slice %42 {offsets = [0, 3], sizes = [2, 1], strides = [1, 1]} : vector<2x49xf32> to vector<2x1xf32>
    %188 = vector.broadcast %187 : vector<2x1xf32> to vector<2x256xf32>
    %189 = arith.mulf %186, %188 : vector<2x256xf32>
    %c0_59 = arith.constant 0 : index
    %c96 = arith.constant 96 : index
    %190 = vector.load %arg6[%c0_59, %c96] : memref<2x512xf32, #tpu.memory_space<vmem>>, vector<2x256xf32>
    %191 = vector.extract_strided_slice %42 {offsets = [0, 10], sizes = [2, 1], strides = [1, 1]} : vector<2x49xf32> to vector<2x1xf32>
    %192 = vector.broadcast %191 : vector<2x1xf32> to vector<2x256xf32>
    %193 = arith.mulf %190, %192 : vector<2x256xf32>
    %194 = arith.addf %189, %193 : vector<2x256xf32>
    %c0_60 = arith.constant 0 : index
    %c112 = arith.constant 112 : index
    %195 = vector.load %arg6[%c0_60, %c112] : memref<2x512xf32, #tpu.memory_space<vmem>>, vector<2x256xf32>
    %196 = vector.extract_strided_slice %42 {offsets = [0, 17], sizes = [2, 1], strides = [1, 1]} : vector<2x49xf32> to vector<2x1xf32>
    %197 = vector.broadcast %196 : vector<2x1xf32> to vector<2x256xf32>
    %198 = arith.mulf %195, %197 : vector<2x256xf32>
    %199 = arith.addf %194, %198 : vector<2x256xf32>
    %c0_61 = arith.constant 0 : index
    %c128_62 = arith.constant 128 : index
    %200 = vector.load %arg6[%c0_61, %c128_62] : memref<2x512xf32, #tpu.memory_space<vmem>>, vector<2x256xf32>
    %201 = vector.extract_strided_slice %42 {offsets = [0, 24], sizes = [2, 1], strides = [1, 1]} : vector<2x49xf32> to vector<2x1xf32>
    %202 = vector.broadcast %201 : vector<2x1xf32> to vector<2x256xf32>
    %203 = arith.mulf %200, %202 : vector<2x256xf32>
    %204 = arith.addf %199, %203 : vector<2x256xf32>
    %c0_63 = arith.constant 0 : index
    %c144 = arith.constant 144 : index
    %205 = vector.load %arg6[%c0_63, %c144] : memref<2x512xf32, #tpu.memory_space<vmem>>, vector<2x256xf32>
    %206 = vector.extract_strided_slice %42 {offsets = [0, 31], sizes = [2, 1], strides = [1, 1]} : vector<2x49xf32> to vector<2x1xf32>
    %207 = vector.broadcast %206 : vector<2x1xf32> to vector<2x256xf32>
    %208 = arith.mulf %205, %207 : vector<2x256xf32>
    %209 = arith.addf %204, %208 : vector<2x256xf32>
    %c0_64 = arith.constant 0 : index
    %c160 = arith.constant 160 : index
    %210 = vector.load %arg6[%c0_64, %c160] : memref<2x512xf32, #tpu.memory_space<vmem>>, vector<2x256xf32>
    %211 = vector.extract_strided_slice %42 {offsets = [0, 38], sizes = [2, 1], strides = [1, 1]} : vector<2x49xf32> to vector<2x1xf32>
    %212 = vector.broadcast %211 : vector<2x1xf32> to vector<2x256xf32>
    %213 = arith.mulf %210, %212 : vector<2x256xf32>
    %214 = arith.addf %209, %213 : vector<2x256xf32>
    %c0_65 = arith.constant 0 : index
    %c176 = arith.constant 176 : index
    %215 = vector.load %arg6[%c0_65, %c176] : memref<2x512xf32, #tpu.memory_space<vmem>>, vector<2x256xf32>
    %216 = vector.extract_strided_slice %42 {offsets = [0, 45], sizes = [2, 1], strides = [1, 1]} : vector<2x49xf32> to vector<2x1xf32>
    %217 = vector.broadcast %216 : vector<2x1xf32> to vector<2x256xf32>
    %218 = arith.mulf %215, %217 : vector<2x256xf32>
    %219 = arith.addf %214, %218 : vector<2x256xf32>
    %220 = arith.addf %185, %219 : vector<2x256xf32>
    %c0_66 = arith.constant 0 : index
    %c81 = arith.constant 81 : index
    %221 = vector.load %arg6[%c0_66, %c81] : memref<2x512xf32, #tpu.memory_space<vmem>>, vector<2x256xf32>
    %222 = vector.extract_strided_slice %42 {offsets = [0, 4], sizes = [2, 1], strides = [1, 1]} : vector<2x49xf32> to vector<2x1xf32>
    %223 = vector.broadcast %222 : vector<2x1xf32> to vector<2x256xf32>
    %224 = arith.mulf %221, %223 : vector<2x256xf32>
    %c0_67 = arith.constant 0 : index
    %c97 = arith.constant 97 : index
    %225 = vector.load %arg6[%c0_67, %c97] : memref<2x512xf32, #tpu.memory_space<vmem>>, vector<2x256xf32>
    %226 = vector.extract_strided_slice %42 {offsets = [0, 11], sizes = [2, 1], strides = [1, 1]} : vector<2x49xf32> to vector<2x1xf32>
    %227 = vector.broadcast %226 : vector<2x1xf32> to vector<2x256xf32>
    %228 = arith.mulf %225, %227 : vector<2x256xf32>
    %229 = arith.addf %224, %228 : vector<2x256xf32>
    %c0_68 = arith.constant 0 : index
    %c113 = arith.constant 113 : index
    %230 = vector.load %arg6[%c0_68, %c113] : memref<2x512xf32, #tpu.memory_space<vmem>>, vector<2x256xf32>
    %231 = vector.extract_strided_slice %42 {offsets = [0, 18], sizes = [2, 1], strides = [1, 1]} : vector<2x49xf32> to vector<2x1xf32>
    %232 = vector.broadcast %231 : vector<2x1xf32> to vector<2x256xf32>
    %233 = arith.mulf %230, %232 : vector<2x256xf32>
    %234 = arith.addf %229, %233 : vector<2x256xf32>
    %c0_69 = arith.constant 0 : index
    %c129 = arith.constant 129 : index
    %235 = vector.load %arg6[%c0_69, %c129] : memref<2x512xf32, #tpu.memory_space<vmem>>, vector<2x256xf32>
    %236 = vector.extract_strided_slice %42 {offsets = [0, 25], sizes = [2, 1], strides = [1, 1]} : vector<2x49xf32> to vector<2x1xf32>
    %237 = vector.broadcast %236 : vector<2x1xf32> to vector<2x256xf32>
    %238 = arith.mulf %235, %237 : vector<2x256xf32>
    %239 = arith.addf %234, %238 : vector<2x256xf32>
    %c0_70 = arith.constant 0 : index
    %c145 = arith.constant 145 : index
    %240 = vector.load %arg6[%c0_70, %c145] : memref<2x512xf32, #tpu.memory_space<vmem>>, vector<2x256xf32>
    %241 = vector.extract_strided_slice %42 {offsets = [0, 32], sizes = [2, 1], strides = [1, 1]} : vector<2x49xf32> to vector<2x1xf32>
    %242 = vector.broadcast %241 : vector<2x1xf32> to vector<2x256xf32>
    %243 = arith.mulf %240, %242 : vector<2x256xf32>
    %244 = arith.addf %239, %243 : vector<2x256xf32>
    %c0_71 = arith.constant 0 : index
    %c161 = arith.constant 161 : index
    %245 = vector.load %arg6[%c0_71, %c161] : memref<2x512xf32, #tpu.memory_space<vmem>>, vector<2x256xf32>
    %246 = vector.extract_strided_slice %42 {offsets = [0, 39], sizes = [2, 1], strides = [1, 1]} : vector<2x49xf32> to vector<2x1xf32>
    %247 = vector.broadcast %246 : vector<2x1xf32> to vector<2x256xf32>
    %248 = arith.mulf %245, %247 : vector<2x256xf32>
    %249 = arith.addf %244, %248 : vector<2x256xf32>
    %c0_72 = arith.constant 0 : index
    %c177 = arith.constant 177 : index
    %250 = vector.load %arg6[%c0_72, %c177] : memref<2x512xf32, #tpu.memory_space<vmem>>, vector<2x256xf32>
    %251 = vector.extract_strided_slice %42 {offsets = [0, 46], sizes = [2, 1], strides = [1, 1]} : vector<2x49xf32> to vector<2x1xf32>
    %252 = vector.broadcast %251 : vector<2x1xf32> to vector<2x256xf32>
    %253 = arith.mulf %250, %252 : vector<2x256xf32>
    %254 = arith.addf %249, %253 : vector<2x256xf32>
    %c1_i32 = arith.constant 1 : i32
    %255 = vector.broadcast %c1_i32 : i32 to vector<1x256xi32>
    %256 = arith.addi %41, %255 : vector<1x256xi32>
    %c0_i32_73 = arith.constant 0 : i32
    %257 = vector.broadcast %c0_i32_73 : i32 to vector<1x256xi32>
    %258 = arith.cmpi sge, %256, %257 : vector<1x256xi32>
    %c1_i32_74 = arith.constant 1 : i32
    %259 = vector.broadcast %c1_i32_74 : i32 to vector<1x256xi32>
    %260 = arith.addi %41, %259 : vector<1x256xi32>
    %c16_i32_75 = arith.constant 16 : i32
    %261 = vector.broadcast %c16_i32_75 : i32 to vector<1x256xi32>
    %262 = arith.cmpi slt, %260, %261 : vector<1x256xi32>
    %263 = arith.andi %258, %262 : vector<1x256xi1>
    %cst_76 = arith.constant 0.000000e+00 : f32
    %264 = vector.shape_cast %263 : vector<1x256xi1> to vector<1x256xi1>
    %265 = vector.broadcast %264 : vector<1x256xi1> to vector<2x256xi1>
    %266 = vector.broadcast %cst_76 : f32 to vector<2x256xf32>
    %267 = arith.select %265, %254, %266 : vector<2x256xi1>, vector<2x256xf32>
    %268 = arith.addf %220, %267 : vector<2x256xf32>
    %c0_77 = arith.constant 0 : index
    %c82 = arith.constant 82 : index
    %269 = vector.load %arg6[%c0_77, %c82] : memref<2x512xf32, #tpu.memory_space<vmem>>, vector<2x256xf32>
    %270 = vector.extract_strided_slice %42 {offsets = [0, 5], sizes = [2, 1], strides = [1, 1]} : vector<2x49xf32> to vector<2x1xf32>
    %271 = vector.broadcast %270 : vector<2x1xf32> to vector<2x256xf32>
    %272 = arith.mulf %269, %271 : vector<2x256xf32>
    %c0_78 = arith.constant 0 : index
    %c98 = arith.constant 98 : index
    %273 = vector.load %arg6[%c0_78, %c98] : memref<2x512xf32, #tpu.memory_space<vmem>>, vector<2x256xf32>
    %274 = vector.extract_strided_slice %42 {offsets = [0, 12], sizes = [2, 1], strides = [1, 1]} : vector<2x49xf32> to vector<2x1xf32>
    %275 = vector.broadcast %274 : vector<2x1xf32> to vector<2x256xf32>
    %276 = arith.mulf %273, %275 : vector<2x256xf32>
    %277 = arith.addf %272, %276 : vector<2x256xf32>
    %c0_79 = arith.constant 0 : index
    %c114 = arith.constant 114 : index
    %278 = vector.load %arg6[%c0_79, %c114] : memref<2x512xf32, #tpu.memory_space<vmem>>, vector<2x256xf32>
    %279 = vector.extract_strided_slice %42 {offsets = [0, 19], sizes = [2, 1], strides = [1, 1]} : vector<2x49xf32> to vector<2x1xf32>
    %280 = vector.broadcast %279 : vector<2x1xf32> to vector<2x256xf32>
    %281 = arith.mulf %278, %280 : vector<2x256xf32>
    %282 = arith.addf %277, %281 : vector<2x256xf32>
    %c0_80 = arith.constant 0 : index
    %c130 = arith.constant 130 : index
    %283 = vector.load %arg6[%c0_80, %c130] : memref<2x512xf32, #tpu.memory_space<vmem>>, vector<2x256xf32>
    %284 = vector.extract_strided_slice %42 {offsets = [0, 26], sizes = [2, 1], strides = [1, 1]} : vector<2x49xf32> to vector<2x1xf32>
    %285 = vector.broadcast %284 : vector<2x1xf32> to vector<2x256xf32>
    %286 = arith.mulf %283, %285 : vector<2x256xf32>
    %287 = arith.addf %282, %286 : vector<2x256xf32>
    %c0_81 = arith.constant 0 : index
    %c146 = arith.constant 146 : index
    %288 = vector.load %arg6[%c0_81, %c146] : memref<2x512xf32, #tpu.memory_space<vmem>>, vector<2x256xf32>
    %289 = vector.extract_strided_slice %42 {offsets = [0, 33], sizes = [2, 1], strides = [1, 1]} : vector<2x49xf32> to vector<2x1xf32>
    %290 = vector.broadcast %289 : vector<2x1xf32> to vector<2x256xf32>
    %291 = arith.mulf %288, %290 : vector<2x256xf32>
    %292 = arith.addf %287, %291 : vector<2x256xf32>
    %c0_82 = arith.constant 0 : index
    %c162 = arith.constant 162 : index
    %293 = vector.load %arg6[%c0_82, %c162] : memref<2x512xf32, #tpu.memory_space<vmem>>, vector<2x256xf32>
    %294 = vector.extract_strided_slice %42 {offsets = [0, 40], sizes = [2, 1], strides = [1, 1]} : vector<2x49xf32> to vector<2x1xf32>
    %295 = vector.broadcast %294 : vector<2x1xf32> to vector<2x256xf32>
    %296 = arith.mulf %293, %295 : vector<2x256xf32>
    %297 = arith.addf %292, %296 : vector<2x256xf32>
    %c0_83 = arith.constant 0 : index
    %c178 = arith.constant 178 : index
    %298 = vector.load %arg6[%c0_83, %c178] : memref<2x512xf32, #tpu.memory_space<vmem>>, vector<2x256xf32>
    %299 = vector.extract_strided_slice %42 {offsets = [0, 47], sizes = [2, 1], strides = [1, 1]} : vector<2x49xf32> to vector<2x1xf32>
    %300 = vector.broadcast %299 : vector<2x1xf32> to vector<2x256xf32>
    %301 = arith.mulf %298, %300 : vector<2x256xf32>
    %302 = arith.addf %297, %301 : vector<2x256xf32>
    %c2_i32 = arith.constant 2 : i32
    %303 = vector.broadcast %c2_i32 : i32 to vector<1x256xi32>
    %304 = arith.addi %41, %303 : vector<1x256xi32>
    %c0_i32_84 = arith.constant 0 : i32
    %305 = vector.broadcast %c0_i32_84 : i32 to vector<1x256xi32>
    %306 = arith.cmpi sge, %304, %305 : vector<1x256xi32>
    %c2_i32_85 = arith.constant 2 : i32
    %307 = vector.broadcast %c2_i32_85 : i32 to vector<1x256xi32>
    %308 = arith.addi %41, %307 : vector<1x256xi32>
    %c16_i32_86 = arith.constant 16 : i32
    %309 = vector.broadcast %c16_i32_86 : i32 to vector<1x256xi32>
    %310 = arith.cmpi slt, %308, %309 : vector<1x256xi32>
    %311 = arith.andi %306, %310 : vector<1x256xi1>
    %cst_87 = arith.constant 0.000000e+00 : f32
    %312 = vector.shape_cast %311 : vector<1x256xi1> to vector<1x256xi1>
    %313 = vector.broadcast %312 : vector<1x256xi1> to vector<2x256xi1>
    %314 = vector.broadcast %cst_87 : f32 to vector<2x256xf32>
    %315 = arith.select %313, %302, %314 : vector<2x256xi1>, vector<2x256xf32>
    %316 = arith.addf %268, %315 : vector<2x256xf32>
    %c0_88 = arith.constant 0 : index
    %c83 = arith.constant 83 : index
    %317 = vector.load %arg6[%c0_88, %c83] : memref<2x512xf32, #tpu.memory_space<vmem>>, vector<2x256xf32>
    %318 = vector.extract_strided_slice %42 {offsets = [0, 6], sizes = [2, 1], strides = [1, 1]} : vector<2x49xf32> to vector<2x1xf32>
    %319 = vector.broadcast %318 : vector<2x1xf32> to vector<2x256xf32>
    %320 = arith.mulf %317, %319 : vector<2x256xf32>
    %c0_89 = arith.constant 0 : index
    %c99 = arith.constant 99 : index
    %321 = vector.load %arg6[%c0_89, %c99] : memref<2x512xf32, #tpu.memory_space<vmem>>, vector<2x256xf32>
    %322 = vector.extract_strided_slice %42 {offsets = [0, 13], sizes = [2, 1], strides = [1, 1]} : vector<2x49xf32> to vector<2x1xf32>
    %323 = vector.broadcast %322 : vector<2x1xf32> to vector<2x256xf32>
    %324 = arith.mulf %321, %323 : vector<2x256xf32>
    %325 = arith.addf %320, %324 : vector<2x256xf32>
    %c0_90 = arith.constant 0 : index
    %c115 = arith.constant 115 : index
    %326 = vector.load %arg6[%c0_90, %c115] : memref<2x512xf32, #tpu.memory_space<vmem>>, vector<2x256xf32>
    %327 = vector.extract_strided_slice %42 {offsets = [0, 20], sizes = [2, 1], strides = [1, 1]} : vector<2x49xf32> to vector<2x1xf32>
    %328 = vector.broadcast %327 : vector<2x1xf32> to vector<2x256xf32>
    %329 = arith.mulf %326, %328 : vector<2x256xf32>
    %330 = arith.addf %325, %329 : vector<2x256xf32>
    %c0_91 = arith.constant 0 : index
    %c131 = arith.constant 131 : index
    %331 = vector.load %arg6[%c0_91, %c131] : memref<2x512xf32, #tpu.memory_space<vmem>>, vector<2x256xf32>
    %332 = vector.extract_strided_slice %42 {offsets = [0, 27], sizes = [2, 1], strides = [1, 1]} : vector<2x49xf32> to vector<2x1xf32>
    %333 = vector.broadcast %332 : vector<2x1xf32> to vector<2x256xf32>
    %334 = arith.mulf %331, %333 : vector<2x256xf32>
    %335 = arith.addf %330, %334 : vector<2x256xf32>
    %c0_92 = arith.constant 0 : index
    %c147 = arith.constant 147 : index
    %336 = vector.load %arg6[%c0_92, %c147] : memref<2x512xf32, #tpu.memory_space<vmem>>, vector<2x256xf32>
    %337 = vector.extract_strided_slice %42 {offsets = [0, 34], sizes = [2, 1], strides = [1, 1]} : vector<2x49xf32> to vector<2x1xf32>
    %338 = vector.broadcast %337 : vector<2x1xf32> to vector<2x256xf32>
    %339 = arith.mulf %336, %338 : vector<2x256xf32>
    %340 = arith.addf %335, %339 : vector<2x256xf32>
    %c0_93 = arith.constant 0 : index
    %c163 = arith.constant 163 : index
    %341 = vector.load %arg6[%c0_93, %c163] : memref<2x512xf32, #tpu.memory_space<vmem>>, vector<2x256xf32>
    %342 = vector.extract_strided_slice %42 {offsets = [0, 41], sizes = [2, 1], strides = [1, 1]} : vector<2x49xf32> to vector<2x1xf32>
    %343 = vector.broadcast %342 : vector<2x1xf32> to vector<2x256xf32>
    %344 = arith.mulf %341, %343 : vector<2x256xf32>
    %345 = arith.addf %340, %344 : vector<2x256xf32>
    %c0_94 = arith.constant 0 : index
    %c179 = arith.constant 179 : index
    %346 = vector.load %arg6[%c0_94, %c179] : memref<2x512xf32, #tpu.memory_space<vmem>>, vector<2x256xf32>
    %347 = vector.extract_strided_slice %42 {offsets = [0, 48], sizes = [2, 1], strides = [1, 1]} : vector<2x49xf32> to vector<2x1xf32>
    %348 = vector.broadcast %347 : vector<2x1xf32> to vector<2x256xf32>
    %349 = arith.mulf %346, %348 : vector<2x256xf32>
    %350 = arith.addf %345, %349 : vector<2x256xf32>
    %c3_i32 = arith.constant 3 : i32
    %351 = vector.broadcast %c3_i32 : i32 to vector<1x256xi32>
    %352 = arith.addi %41, %351 : vector<1x256xi32>
    %c0_i32_95 = arith.constant 0 : i32
    %353 = vector.broadcast %c0_i32_95 : i32 to vector<1x256xi32>
    %354 = arith.cmpi sge, %352, %353 : vector<1x256xi32>
    %c3_i32_96 = arith.constant 3 : i32
    %355 = vector.broadcast %c3_i32_96 : i32 to vector<1x256xi32>
    %356 = arith.addi %41, %355 : vector<1x256xi32>
    %c16_i32_97 = arith.constant 16 : i32
    %357 = vector.broadcast %c16_i32_97 : i32 to vector<1x256xi32>
    %358 = arith.cmpi slt, %356, %357 : vector<1x256xi32>
    %359 = arith.andi %354, %358 : vector<1x256xi1>
    %cst_98 = arith.constant 0.000000e+00 : f32
    %360 = vector.shape_cast %359 : vector<1x256xi1> to vector<1x256xi1>
    %361 = vector.broadcast %360 : vector<1x256xi1> to vector<2x256xi1>
    %362 = vector.broadcast %cst_98 : f32 to vector<2x256xf32>
    %363 = arith.select %361, %350, %362 : vector<2x256xi1>, vector<2x256xf32>
    %364 = arith.addf %316, %363 : vector<2x256xf32>
    %365 = vector.extract_strided_slice %364 {offsets = [0, 0], sizes = [1, 256], strides = [1, 1]} : vector<2x256xf32> to vector<1x256xf32>
    %366 = vector.extract_strided_slice %364 {offsets = [1, 0], sizes = [1, 256], strides = [1, 1]} : vector<2x256xf32> to vector<1x256xf32>
    %367 = arith.addf %365, %366 : vector<1x256xf32>
    %368 = arith.negf %367 : vector<1x256xf32>
    %369 = math.exp %368 : vector<1x256xf32>
    %cst_99 = arith.constant 1.000000e+00 : f32
    %370 = vector.broadcast %cst_99 : f32 to vector<1x256xf32>
    %371 = arith.addf %370, %369 : vector<1x256xf32>
    %372 = arith.divf %370, %371 : vector<1x256xf32>
    %c0_100 = arith.constant 0 : index
    %c0_101 = arith.constant 0 : index
    %c0_102 = arith.constant 0 : index
    %373 = vector.load %arg2[%c0_100, %c0_101, %c0_102] : memref<1x16x256xf32, #tpu.memory_space<vmem>>, vector<1x16x256xf32>
    %374 = vector.shape_cast %373 : vector<1x16x256xf32> to vector<16x256xf32>
    %375 = vector.broadcast %22 : vector<16x1xf32> to vector<16x256xf32>
    %376 = arith.mulf %374, %375 : vector<16x256xf32>
    %377 = vector.broadcast %372 : vector<1x256xf32> to vector<16x256xf32>
    %378 = arith.mulf %376, %377 : vector<16x256xf32>
    %c0_103 = arith.constant 0 : index
    %c0_104 = arith.constant 0 : index
    %c0_105 = arith.constant 0 : index
    %379 = vector.load %arg5[%c0_103, %c0_104, %c0_105] : memref<1x16x256xf32, #tpu.memory_space<vmem>>, vector<1x16x256xf32>
    %380 = vector.shape_cast %379 : vector<1x16x256xf32> to vector<16x256xf32>
    %381 = vector.shape_cast %378 : vector<16x256xf32> to vector<1x16x256xf32>
    tpu.vector_store %arg5[%c0_103, %c0_104, %c0_105], %381 {strides = array<i32>} : memref<1x16x256xf32, #tpu.memory_space<vmem>>, vector<1x16x256xf32>,
    return
  }
  func.func @transform_0(%arg0: i32) -> (i32, i32) {
    %c0_i32 = arith.constant 0 : i32
    %c0_i32_0 = arith.constant 0 : i32
    %c0_i32_1 = arith.constant 0 : i32
    return %c0_i32, %c0_i32_0 : i32, i32
  }
  func.func @transform_1(%arg0: i32) -> (i32, i32, i32) {
    %c0_i32 = arith.constant 0 : i32
    %c0_i32_0 = arith.constant 0 : i32
    %c0_i32_1 = arith.constant 0 : i32
    return %arg0, %c0_i32, %c0_i32_0 : i32, i32, i32
  }
  func.func @transform_2(%arg0: i32) -> (i32, i32) {
    %c0_i32 = arith.constant 0 : i32
    %c0_i32_0 = arith.constant 0 : i32
    %c0_i32_1 = arith.constant 0 : i32
    return %c0_i32, %c0_i32_0 : i32, i32
  }
  func.func @transform_3(%arg0: i32) -> (i32, i32) {
    %c0_i32 = arith.constant 0 : i32
    %c0_i32_0 = arith.constant 0 : i32
    %c0_i32_1 = arith.constant 0 : i32
    return %c0_i32, %c0_i32_0 : i32, i32
  }
  func.func @transform_4(%arg0: i32) -> (i32, i32, i32) {
    %c0_i32 = arith.constant 0 : i32
    %c0_i32_0 = arith.constant 0 : i32
    %c0_i32_1 = arith.constant 0 : i32
    return %arg0, %c0_i32, %c0_i32_0 : i32, i32, i32
  }
}

</mosaic_0001>

<llo_original>
// kernel: tpu_custom_call.1
$region0: #{tpu_custom_call.1}
  #allocation0 [shape = 'u32[]', space=smem, size = 0x4, offset = 0x4, fixed_abs, tag = 'smem constant byte address 0x4 - core index']
  #allocation1 [shape = 'u32[144,128]{1,0:T(1,128)}', space=vmem, size = 0x12000, scoped, tag = 'internal scratch']
  #allocation2 [shape = 'f32[2,512]{1,0:T(2,128)}', space=vmem, size = 0x1000, scoped, tag = 'scratch operand']
  %s0 = inlined_call_operand.vmem [shape: f32[2,49], index: 0, kind: input, shape index: {}]
  %s1 = inlined_call_operand.hbm [shape: f32[2,16,256], index: 1, kind: input, shape index: {}]
  %s2 = inlined_call_operand.vmem [shape: f32[2,16], index: 2, kind: input, shape index: {}]
  %s3 = inlined_call_operand.vmem [shape: f32[16,2], index: 3, kind: input, shape index: {}]
  %s4 = inlined_call_operand.hbm [shape: f32[2,16,256], index: 4, kind: output, shape index: {}]
  %s5 = sld [smem:[#allocation0]]
  $region53: #{tpu_custom_call.1} parent=0
    _
  %s7 = ssub.s32 1, %s5
  %s8 = scalar_select 0, %s7, %s5
  $region1: #{tpu_custom_call.1} parent=0
    #allocation3 [shape = 'u8[32768]{0}', space=vmem, size = 0x8000, scoped, tag = 'input window, operand 1']
    #allocation4 [shape = 's32[2]{0}', space=sflag, size = 0x8, scoped, tag = 'scoped memory for tpu_custom_call.1']
    #allocation5 [shape = 's32[2]{0}', space=sflag, size = 0x8, scoped, tag = 'scoped memory for tpu_custom_call.1']
    #allocation6 [shape = 'u8[32768]{0}', space=vmem, size = 0x8000, scoped, tag = 'output window, operand 0']
    %9 = vsyncpa [#allocation4], 0
    %s10 = scalar_lea.sflag [#allocation4], 1
    %11 = vsyncpa %s10, 0
    %12 = vsyncpa [#allocation5], 0
    %s13 = scalar_lea.sflag [#allocation5], 1
    %14 = vsyncpa %s13, 0
    loop: start=0, step=1, limit=4
    $region2: #{tpu_custom_call.1} parent=1 // loop_pre_header
      _
    $region3: #{tpu_custom_call.1} parent=1 // loop_header
      %s16 = sphi 0, %s20
      %p17 = scmp.ge.s32.totalorder %s16, 4
      %s24 = sphi 0, %s24
      %s26 = sphi 0, %s24
      %s27 = sphi 0, %s26
      %s41 = sphi 0, %s27
      %s47 = sphi 0, %s49
      %s50 = sphi 0, %s47
      %s51 = sphi 0, %s50
      %s67 = sphi 0, %s51
      %s71 = sphi 0, %s71
      %s73 = sphi 0, %s71
      %s74 = sphi 0, %s73
      %s88 = sphi 0, %s74
      %s92 = sphi 0, %s92
      %s94 = sphi 0, %s92
      %s95 = sphi 0, %s94
      %s109 = sphi 0, %s95
      %s115 = sphi 0, %s117
      %s118 = sphi 0, %s115
      %s119 = sphi 0, %s118
      %s135 = sphi 0, %s119
    $region4: #{tpu_custom_call.1} parent=1 // loop_header_branch
      %19 = sbr.rel (%p17) target = $region8
    $region5: #{tpu_custom_call.1} parent=1 // loop_body
      %s21 = ssub.s32 %s16, 1
      %s22 = ssub.s32 %s16, 2
      %s23 = sadd.s32 %s16, 1
      %s25 = sadd.s32 %s24, 1
      %p28 = scmp.eq.s32.totalorder %s16, 1
      %p29 = scmp.ne.s32.totalorder %s24, %s26
      %p30 = scmp.eq.s32.totalorder %s16, 0
      %p31 = por %p29, %p30
      %p32 = scmp.ne.s32.totalorder %s24, %s26
      %p33 = scmp.eq.s32.totalorder %s21, 1
      %p34 = por %p32, %p33
      %p35 = scmp.ne.s32.totalorder %s26, %s27
      %p36 = scmp.eq.s32.totalorder %s21, 0
      %p37 = por %p35, %p36
      %p38 = scmp.ne.s32.totalorder %s26, %s27
      %p39 = scmp.eq.s32.totalorder %s22, 1
      %p40 = por %p38, %p39
      %p42 = scmp.ne.s32.totalorder %s27, %s41
      %p43 = scmp.eq.s32.totalorder %s22, 0
      %p44 = por %p42, %p43
      %s45 = ssub.s32 %s16, %s23
      %p46 = scmp.eq.s32.totalorder %s45, 0
      %s48 = sadd.s32 %s47, 1
      %s49 = scalar_select %p46, %s47, %s48
      %p52 = pneg %p46
      %p53 = scmp.eq.s32.totalorder %s16, 1
      %p54 = por %p52, %p53
      %p55 = scmp.ne.s32.totalorder %s47, %s50
      %p56 = scmp.eq.s32.totalorder %s16, 0
      %p57 = por %p55, %p56
      %p58 = scmp.ne.s32.totalorder %s47, %s50
      %p59 = scmp.eq.s32.totalorder %s21, 1
      %p60 = por %p58, %p59
      %p61 = scmp.ne.s32.totalorder %s50, %s51
      %p62 = scmp.eq.s32.totalorder %s21, 0
      %p63 = por %p61, %p62
      %p64 = scmp.ne.s32.totalorder %s50, %s51
      %p65 = scmp.eq.s32.totalorder %s22, 1
      %p66 = por %p64, %p65
      %p68 = scmp.ne.s32.totalorder %s51, %s67
      %p69 = scmp.eq.s32.totalorder %s22, 0
      %p70 = por %p68, %p69
      %s72 = sadd.s32 %s71, 1
      %p75 = scmp.eq.s32.totalorder %s16, 1
      %p76 = scmp.ne.s32.totalorder %s71, %s73
      %p77 = scmp.eq.s32.totalorder %s16, 0
      %p78 = por %p76, %p77
      %p79 = scmp.ne.s32.totalorder %s71, %s73
      %p80 = scmp.eq.s32.totalorder %s21, 1
      %p81 = por %p79, %p80
      %p82 = scmp.ne.s32.totalorder %s73, %s74
      %p83 = scmp.eq.s32.totalorder %s21, 0
      %p84 = por %p82, %p83
      %p85 = scmp.ne.s32.totalorder %s73, %s74
      %p86 = scmp.eq.s32.totalorder %s22, 1
      %p87 = por %p85, %p86
      %p89 = scmp.ne.s32.totalorder %s74, %s88
      %p90 = scmp.eq.s32.totalorder %s22, 0
      %p91 = por %p89, %p90
      %s93 = sadd.s32 %s92, 1
      %p96 = scmp.eq.s32.totalorder %s16, 1
      %p97 = scmp.ne.s32.totalorder %s92, %s94
      %p98 = scmp.eq.s32.totalorder %s16, 0
      %p99 = por %p97, %p98
      %p100 = scmp.ne.s32.totalorder %s92, %s94
      %p101 = scmp.eq.s32.totalorder %s21, 1
      %p102 = por %p100, %p101
      %p103 = scmp.ne.s32.totalorder %s94, %s95
      %p104 = scmp.eq.s32.totalorder %s21, 0
      %p105 = por %p103, %p104
      %p106 = scmp.ne.s32.totalorder %s94, %s95
      %p107 = scmp.eq.s32.totalorder %s22, 1
      %p108 = por %p106, %p107
      %p110 = scmp.ne.s32.totalorder %s95, %s109
      %p111 = scmp.eq.s32.totalorder %s22, 0
      %p112 = por %p110, %p111
      %s113 = ssub.s32 %s16, %s23
      %p114 = scmp.eq.s32.totalorder %s113, 0
      %s116 = sadd.s32 %s115, 1
      %s117 = scalar_select %p114, %s115, %s116
      %p120 = pneg %p114
      %p121 = scmp.eq.s32.totalorder %s16, 1
      %p122 = por %p120, %p121
      %p123 = scmp.ne.s32.totalorder %s115, %s118
      %p124 = scmp.eq.s32.totalorder %s16, 0
      %p125 = por %p123, %p124
      %p126 = scmp.ne.s32.totalorder %s115, %s118
      %p127 = scmp.eq.s32.totalorder %s21, 1
      %p128 = por %p126, %p127
      %p129 = scmp.ne.s32.totalorder %s118, %s119
      %p130 = scmp.eq.s32.totalorder %s21, 0
      %p131 = por %p129, %p130
      %p132 = scmp.ne.s32.totalorder %s118, %s119
      %p133 = scmp.eq.s32.totalorder %s22, 1
      %p134 = por %p132, %p133
      %p136 = scmp.ne.s32.totalorder %s119, %s135
      %p137 = scmp.eq.s32.totalorder %s22, 0
      %p138 = por %p136, %p137
      %p139 = scmp.le.s32.totalorder 1, %s16
      %p140 = scmp.lt.s32.totalorder %s16, 3
      %p141 = pnand %p139, %p140
      %p142 = pneg %p141
      // Predicated region
      $region9: #{tpu_custom_call.1} parent=5 // pred_check
        _
      $region10: #{tpu_custom_call.1} parent=5 // pred_check_branch
        %144 = sbr.rel (%p141) target = $region12
      $region11: #{tpu_custom_call.1} parent=5 // pred_region
        %s145 = ssub.s32 %s16, 1
        // Predicated region
        $region13: #{tpu_custom_call.1} parent=11 // pred_check
          %p146 = pneg %p37
        $region14: #{tpu_custom_call.1} parent=11 // pred_check_branch
          %148 = sbr.rel (%p146) target = $region16
        $region15: #{tpu_custom_call.1} parent=11 // pred_region
          _
        $region16: #{tpu_custom_call.1} parent=11 // pred_fallthru
          _
        // Predicated region
        $region17: #{tpu_custom_call.1} parent=11 // pred_check
          %p149 = pneg %p84
        $region18: #{tpu_custom_call.1} parent=11 // pred_check_branch
          %151 = sbr.rel (%p149) target = $region20
        $region19: #{tpu_custom_call.1} parent=11 // pred_region
          _
        $region20: #{tpu_custom_call.1} parent=11 // pred_fallthru
          _
        // Predicated region
        $region21: #{tpu_custom_call.1} parent=11 // pred_check
          %p152 = pneg %p105
        $region22: #{tpu_custom_call.1} parent=11 // pred_check_branch
          %154 = sbr.rel (%p152) target = $region24
        $region23: #{tpu_custom_call.1} parent=11 // pred_region
          _
        $region24: #{tpu_custom_call.1} parent=11 // pred_fallthru
          _
      $region12: #{tpu_custom_call.1} parent=5 // pred_fallthru
        _
      %p155 = scmp.lt.s32.totalorder %s16, 2
      // Predicated region
      $region25: #{tpu_custom_call.1} parent=5 // pred_check
        %p156 = pneg %p155
      $region26: #{tpu_custom_call.1} parent=5 // pred_check_branch
        %158 = sbr.rel (%p156) target = $region28
      $region27: #{tpu_custom_call.1} parent=5 // pred_region
        // Predicated region
        $region29: #{tpu_custom_call.1} parent=27 // pred_check
          %p159 = pneg %p57
        $region30: #{tpu_custom_call.1} parent=27 // pred_check_branch
          %161 = sbr.rel (%p159) target = $region32
        $region31: #{tpu_custom_call.1} parent=27 // pred_region
          %s162 = sand.u32 %s47, 1
          %s163 = scalar_lea.sflag [#allocation4], %s162
          %s164 = sand.u32 %s47, 1
          %s165 = smul.addr %s164, 32
          %s166 = scalar_lea.vmem [#allocation3], %s165
          %s168 = ssub.s32 512, 512
          %169 = vsyncadd %s163, %s168
          %s170 = smul.addr %s16, 4
          %s171 = smul.addr %s170, 128
          %s172 = scalar_lea.hbm %s1, %s171
          %s173 = sshll.u32 %s166, 4
          %s174 = int_to_ptr.vmem [resolvable:$true] %s173
          %179 = dma.hbm_to_vmem [thread:$0]  %s172, 512, %s174, %s163, 256, 256, 16
        $region32: #{tpu_custom_call.1} parent=27 // pred_fallthru
          _
      $region28: #{tpu_custom_call.1} parent=5 // pred_fallthru
        _
      %p180 = scmp.le.s32.totalorder 1, %s16
      %p181 = scmp.lt.s32.totalorder %s16, 3
      %p182 = pnand %p180, %p181
      %p183 = pneg %p182
      // Predicated region
      $region33: #{tpu_custom_call.1} parent=5 // pred_check
        _
      $region34: #{tpu_custom_call.1} parent=5 // pred_check_branch
        %185 = sbr.rel (%p182) target = $region36
      $region35: #{tpu_custom_call.1} parent=5 // pred_region
        %s186 = ssub.s32 %s16, 1
        %s187 = sand.u32 %s50, 1
        %s188 = scalar_lea.sflag [#allocation4], %s187
        %s189 = sand.u32 %s50, 1
        %s190 = smul.addr %s189, 32
        %s191 = scalar_lea.vmem [#allocation3], %s190
        // Predicated region
        $region37: #{tpu_custom_call.1} parent=35 // pred_check
          %p192 = pneg %p63
        $region38: #{tpu_custom_call.1} parent=35 // pred_check_branch
          %194 = sbr.rel (%p192) target = $region40
        $region39: #{tpu_custom_call.1} parent=35 // pred_region
          %195 = dma.done %s188, 512
        $region40: #{tpu_custom_call.1} parent=35 // pred_fallthru
          _
        %p196 = pneg %p37
        %p197 = pneg %p34
        %s198 = sand.u32 %s50, 1
        %s199 = scalar_lea.sflag [#allocation4], %s198
        %s200 = sand.u32 %s50, 1
        %s201 = smul.addr %s200, 32
        %s202 = scalar_lea.vmem [#allocation3], %s201
        %p203 = pneg %p63
        %p204 = pneg %p60
        %p205 = pneg %p84
        %p206 = pneg %p81
        %p207 = pneg %p105
        %p208 = pneg %p102
        %p209 = pneg %p131
        %p210 = pneg %p128
        %s211 = sand.u32 %s118, 1
        %s212 = scalar_lea.sflag [#allocation5], %s211
        %s213 = sand.u32 %s118, 1
        %s214 = smul.addr %s213, 32
        %s215 = scalar_lea.vmem [#allocation6], %s214
        %v216 = vld [vmem:[%s191] sm:$0xff]
        %v217 = vld [vmem:[%s191 + $0x8] sm:$0xff]
        %v218 = vld [vmem:[%s191 + $0x10] sm:$0xff]
        %v219 = vld [vmem:[%s191 + $0x18] sm:$0xff]
        %v220 = vadd.f32 %v216, %v217
        %221 = vadd.xlane.f32.xlu0 %v220
        %v222 = vpop.xlane.xlu0 %221
        %v223 = vadd.f32 %v218, %v219
        %224 = vadd.xlane.f32.xlu0 %v223
        %v225 = vpop.xlane.xlu0 %224
        %v226 = vmul.f32 %v222, 0.00390625
        %v227 = vmul.f32 %v225, 0.00390625
        %v228 = vmax.f32 %v216, %v217
        %229 = vmax.xlane.f32.xlu0 %v228
        %v230 = vpop.xlane.xlu0 %229
        %v231 = vmax.f32 %v218, %v219
        %232 = vmax.xlane.f32.xlu0 %v231
        %v233 = vpop.xlane.xlu0 %232
        %vm234 = vcmask 7168
        %v235 = vsel %vm234, %v226, %v230
        %v236 = vsel %vm234, %v227, %v233
        %v237 = vld [vmem:[%s2] sm:$0x3]
        %v238 = vld [vmem:[%s3] sm:$0xff]
        %v239 = vld [vmem:[%s3 + $0x8] sm:$0xff]
        %vm240 = vcmask 130048
        %v242 = vsel %vm240, %v237, 0
        %244 = vmatprep.subr.mxu0 0.0
        %245 = vmatpush1.msra.mxu0 %v235
        %246 = vmatprep.subr.mxu0 0.0
        %247 = vmatpush1.msra.mxu0 %v236
        %248 = vmatprep.subr.mxu0 0.0
        %249 = vmatpush1.msra.mxu0 0.0
        %250 = vmatprep.subr.mxu0 0.0
        %251 = vmatpush1.msra.mxu0 0.0
        %252 = vmatprep.subr.mxu0 0.0
        %253 = vmatpush1.msra.mxu0 0.0
        %254 = vmatprep.subr.mxu0 0.0
        %255 = vmatpush1.msra.mxu0 0.0
        %256 = vmatprep.subr.mxu0 0.0
        %257 = vmatpush1.msra.mxu0 0.0
        %258 = vmatprep.subr.mxu0 0.0
        %259 = vmatpush1.msra.mxu0 0.0
        %260 = vmatprep.subr.mxu0 0.0
        %261 = vmatpush1.msra.mxu0 0.0
        %262 = vmatprep.subr.mxu0 0.0
        %263 = vmatpush1.msra.mxu0 0.0
        %264 = vmatprep.subr.mxu0 0.0
        %265 = vmatpush1.msra.mxu0 0.0
        %266 = vmatprep.subr.mxu0 0.0
        %267 = vmatpush1.msra.mxu0 0.0
        %268 = vmatprep.subr.mxu0 0.0
        %269 = vmatpush1.msra.mxu0 0.0
        %270 = vmatprep.subr.mxu0 0.0
        %271 = vmatpush1.msra.mxu0 0.0
        %272 = vmatprep.subr.mxu0 0.0
        %273 = vmatpush1.msra.mxu0 0.0
        %274 = vmatprep.subr.mxu0 0.0
        %275 = vmatpush1.msra.mxu0 0.0
        %276 = vmatprep.subr.mxu0 0.0
        %277 = vmatpush1.msra.mxu0 0.0
        %278 = vmatprep.subr.mxu0 0.0
        %279 = vmatpush1.msra.mxu0 0.0
        %280 = vmatprep.subr.mxu0 0.0
        %281 = vmatpush1.msra.mxu0 0.0
        %282 = vmatprep.subr.mxu0 0.0
        %283 = vmatpush1.msra.mxu0 0.0
        %284 = vmatprep.subr.mxu0 0.0
        %285 = vmatpush1.msra.mxu0 0.0
        %286 = vmatprep.subr.mxu0 0.0
        %287 = vmatpush1.msra.mxu0 0.0
        %288 = vmatprep.subr.mxu0 0.0
        %289 = vmatpush1.msra.mxu0 0.0
        %290 = vmatprep.subr.mxu0 0.0
        %291 = vmatpush1.msra.mxu0 0.0
        %292 = vmatprep.subr.mxu0 0.0
        %293 = vmatpush1.msra.mxu0 0.0
        %294 = vmatprep.subr.mxu0 0.0
        %295 = vmatpush1.msra.mxu0 0.0
        %296 = vmatprep.subr.mxu0 0.0
        %297 = vmatpush1.msra.mxu0 0.0
        %298 = vmatprep.subr.mxu0 0.0
        %299 = vmatpush1.msra.mxu0 0.0
        %300 = vmatprep.subr.mxu0 0.0
        %301 = vmatpush1.msra.mxu0 0.0
        %302 = vmatprep.subr.mxu0 0.0
        %303 = vmatpush1.msra.mxu0 0.0
        %304 = vmatprep.subr.mxu0 0.0
        %305 = vmatpush1.msra.mxu0 0.0
        %306 = vmatprep.subr.mxu0 0.0
        %307 = vmatpush1.msra.mxu0 0.0
        %308 = vmatprep.mubr.f32.mxu0 0.0
        %309 = vmatmul.mubr.f32.gmra.mrb[0].mxu0 %v242
        %v310 = vpop.f32.mrb[0].mxu0
        %v311 = vadd.f32 0.0, %v310
        %v312 = vpop.f32.mrb[0].mxu0
        %313 = vdwg.mxu0
        %v314 = vmax.f32 %v311, 0.0
        %vm315 = vcmask 15360
        %v317 = vsel %vm315, %v238, 0
        %v320 = vsel %vm315, %v239, 0
        %vm322 = vcmask 1041408
        %v324 = vsel %vm322, %v314, 0
        %326 = vmatprep.subr.mxu0 0.0
        %327 = vmatpush1.msra.mxu0 %v324
        %328 = vmatprep.subr.mxu0 0.0
        %329 = vmatpush1.msra.mxu0 0.0
        %330 = vmatprep.subr.mxu0 0.0
        %331 = vmatpush1.msra.mxu0 0.0
        %332 = vmatprep.subr.mxu0 0.0
        %333 = vmatpush1.msra.mxu0 0.0
        %334 = vmatprep.subr.mxu0 0.0
        %335 = vmatpush1.msra.mxu0 0.0
        %336 = vmatprep.subr.mxu0 0.0
        %337 = vmatpush1.msra.mxu0 0.0
        %338 = vmatprep.subr.mxu0 0.0
        %339 = vmatpush1.msra.mxu0 0.0
        %340 = vmatprep.subr.mxu0 0.0
        %341 = vmatpush1.msra.mxu0 0.0
        %342 = vmatprep.subr.mxu0 0.0
        %343 = vmatpush1.msra.mxu0 0.0
        %344 = vmatprep.subr.mxu0 0.0
        %345 = vmatpush1.msra.mxu0 0.0
        %346 = vmatprep.subr.mxu0 0.0
        %347 = vmatpush1.msra.mxu0 0.0
        %348 = vmatprep.subr.mxu0 0.0
        %349 = vmatpush1.msra.mxu0 0.0
        %350 = vmatprep.subr.mxu0 0.0
        %351 = vmatpush1.msra.mxu0 0.0
        %352 = vmatprep.subr.mxu0 0.0
        %353 = vmatpush1.msra.mxu0 0.0
        %354 = vmatprep.subr.mxu0 0.0
        %355 = vmatpush1.msra.mxu0 0.0
        %356 = vmatprep.subr.mxu0 0.0
        %357 = vmatpush1.msra.mxu0 0.0
        %358 = vmatprep.subr.mxu0 0.0
        %359 = vmatpush1.msra.mxu0 0.0
        %360 = vmatprep.subr.mxu0 0.0
        %361 = vmatpush1.msra.mxu0 0.0
        %362 = vmatprep.subr.mxu0 0.0
        %363 = vmatpush1.msra.mxu0 0.0
        %364 = vmatprep.subr.mxu0 0.0
        %365 = vmatpush1.msra.mxu0 0.0
        %366 = vmatprep.subr.mxu0 0.0
        %367 = vmatpush1.msra.mxu0 0.0
        %368 = vmatprep.subr.mxu0 0.0
        %369 = vmatpush1.msra.mxu0 0.0
        %370 = vmatprep.subr.mxu0 0.0
        %371 = vmatpush1.msra.mxu0 0.0
        %372 = vmatprep.subr.mxu0 0.0
        %373 = vmatpush1.msra.mxu0 0.0
        %374 = vmatprep.subr.mxu0 0.0
        %375 = vmatpush1.msra.mxu0 0.0
        %376 = vmatprep.subr.mxu0 0.0
        %377 = vmatpush1.msra.mxu0 0.0
        %378 = vmatprep.subr.mxu0 0.0
        %379 = vmatpush1.msra.mxu0 0.0
        %380 = vmatprep.subr.mxu0 0.0
        %381 = vmatpush1.msra.mxu0 0.0
        %382 = vmatprep.subr.mxu0 0.0
        %383 = vmatpush1.msra.mxu0 0.0
        %384 = vmatprep.subr.mxu0 0.0
        %385 = vmatpush1.msra.mxu0 0.0
        %386 = vmatprep.subr.mxu0 0.0
        %387 = vmatpush1.msra.mxu0 0.0
        %388 = vmatprep.subr.mxu0 0.0
        %389 = vmatpush1.msra.mxu0 0.0
        %390 = vmatprep.mubr.f32.mxu0 0.0
        %391 = vmatmul.mubr.f32.gmra.mrb[0].mxu0 %v317
        %v392 = vpop.f32.mrb[0].mxu0
        %v393 = vadd.f32 0.0, %v392
        %v394 = vpop.f32.mrb[0].mxu0
        %395 = vmatprep.mubr.f32.mxu0 0.0
        %396 = vmatmul.mubr.f32.gmra.mrb[0].mxu0 %v320
        %v397 = vpop.f32.mrb[0].mxu0
        %v398 = vadd.f32 0.0, %v397
        %v399 = vpop.f32.mrb[0].mxu0
        %400 = vdwg.mxu0
        %403 = vrot.lane.b32.xlu0 %v393, 127
        %v404 = vpop.permute.xlu0 %403
        %405 = vrot.lane.b32.xlu0 %v398, 127
        %v406 = vpop.permute.xlu0 %405
        %v409 = vadd.f32 %v393, %v404
        %v410 = vadd.f32 %v398, %v406
        %v411 = vxor.u32 %v409, 2147483648
        %v412 = vxor.u32 %v410, 2147483648
        %v413 = vmul.f32 %v411, 1.442695
        %v414 = vpow.pop %v413
        %v415 = vmul.f32 %v412, 1.442695
        %v416 = vpow.pop %v415
        %v417 = vadd.f32 %v414, 1.0
        %v418 = vadd.f32 %v416, 1.0
        %v419 = vrcp.pop %v417
        %v420 = vmul.f32 1.0, %v419
        %v421 = vrcp.pop %v418
        %v422 = vmul.f32 1.0, %v421
        %423 = vst [vmem:[#allocation2] sm:$0x3] 0.0
        %424 = vst [vmem:[#allocation2 + $0x6] sm:$0x3] 0.0
        %v425 = vld [vmem:[%s191] sm:$0xff]
        %v426 = vld [vmem:[%s191 + $0x8] sm:$0xff]
        %v427 = vld [vmem:[%s191 + $0x10] sm:$0xff]
        %v428 = vld [vmem:[%s191 + $0x18] sm:$0xff]
        %430 = vset.pattern.permute.xlu0 0
        %431 = vperm.xlu0 %430, %v420
        %v432 = vpop.permute.xlu0 %431
        %435 = vset.pattern.permute.xlu0 0
        %436 = vperm.xlu0 %435, %v422
        %v437 = vpop.permute.xlu0 %436
        %v439 = vmul.f32 %v425, %v432
        %v440 = vmul.f32 %v426, %v432
        %v441 = vmul.f32 %v427, %v437
        %v442 = vmul.f32 %v428, %v437
        %v443 = vadd.f32 %v439, %v441
        %v444 = vrot.slane %v443, 4
        %v445 = vadd.f32 %v443, %v444
        %v446 = vrot.slane %v445, 2
        %v447 = vadd.f32 %v445, %v446
        %v448 = vrot.slane %v447, 1
        %v449 = vadd.f32 %v447, %v448
        %v450 = vadd.f32 %v440, %v442
        %v451 = vrot.slane %v450, 4
        %v452 = vadd.f32 %v450, %v451
        %v453 = vrot.slane %v452, 2
        %v454 = vadd.f32 %v452, %v453
        %v455 = vrot.slane %v454, 1
        %v456 = vadd.f32 %v454, %v455
        %v457 = vmul.f32 %v449, 0.0625
        %v458 = vmul.f32 %v456, 0.0625
        %v459 = vmax.f32 %v439, %v441
        %v460 = vrot.slane %v459, 4
        %v461 = vmax.f32 %v459, %v460
        %v462 = vrot.slane %v461, 2
        %v463 = vmax.f32 %v461, %v462
        %v464 = vrot.slane %v463, 1
        %v465 = vmax.f32 %v463, %v464
        %v466 = vmax.f32 %v440, %v442
        %v467 = vrot.slane %v466, 4
        %v468 = vmax.f32 %v466, %v467
        %v469 = vrot.slane %v468, 2
        %v470 = vmax.f32 %v468, %v469
        %v471 = vrot.slane %v470, 1
        %v472 = vmax.f32 %v470, %v471
        %v475 = vcombine.low %v457, %v458
        %v477 = vunpack.c.l.s4 1966171168
        %v478 = vunpack.c.0.s8 %v477
        %v479 = vlaneseq
        %v480 = vshrl.u32 %v479, 7
        %v481 = vsub.s32 %v478, %v480
        %v482 = vrot.slane %v475, %v481
        %v484 = vunpack.c.l.s4 1966171168
        %v485 = vunpack.c.0.s8 %v484
        %v486 = vlaneseq
        %v487 = vshrl.u32 %v486, 7
        %v488 = vsub.s32 %v485, %v487
        %v489 = vrot.slane %v482, %v488
        %v491 = vlaneseq
        %vm492 = vcmp.ge.s32.totalorder %v491, 0
        %vm493 = vcmp.lt.s32.totalorder %v491, 256
        %vm494 = vmand %vm492, %vm493
        %s495 = scalar_lea.vmem [#allocation2], 2
        %496 = vst.msk [vmem:[%s495] ss:$2 sm:$0x3] %vm494, %v489
        %v499 = vcombine.low %v465, %v472
        %v501 = vunpack.c.l.s4 1966171168
        %v502 = vunpack.c.0.s8 %v501
        %v503 = vlaneseq
        %v504 = vshrl.u32 %v503, 7
        %v505 = vsub.s32 %v502, %v504
        %v506 = vrot.slane %v499, %v505
        %v508 = vunpack.c.l.s4 1966171168
        %v509 = vunpack.c.0.s8 %v508
        %v510 = vlaneseq
        %v511 = vshrl.u32 %v510, 7
        %v512 = vsub.s32 %v509, %v511
        %v513 = vrot.slane %v506, %v512
        %s515 = scalar_lea.vmem [#allocation2], 3
        %516 = vst.msk [vmem:[%s515] ss:$2 sm:$0x3] %vm494, %v513
        %v517 = vlaneseq
        %v518 = vand.u32 %v517, 127
        %v519 = vadd.s32 %v518, 128
        %v520 = vand.u32 %v518, 15
        %v521 = vand.u32 %v519, 15
        %v522 = vld [vmem:[%s0] sm:$0x3]
        %v523 = vld [vmem:[#allocation2] sm:$0x3f]
        %525 = vset.pattern.permute.xlu0 0
        %526 = vperm.xlu0 %525, %v522
        %v527 = vpop.permute.xlu0 %526
        %v529 = vunpack.c.l.s4 269488144
        %v530 = vunpack.c.0.s8 %v529
        %v531 = vlaneseq
        %v532 = vshrl.u32 %v531, 7
        %v533 = vsub.s32 %v530, %v532
        %v534 = vrot.slane %v527, %v533
        %v536 = vmul.f32 %v523, %v534
        %537 = vset.pattern.permute.xlu0 7
        %538 = vperm.xlu0 %537, %v522
        %v539 = vpop.permute.xlu0 %538
        %v541 = vunpack.c.l.s4 269488144
        %v542 = vunpack.c.0.s8 %v541
        %v543 = vlaneseq
        %v544 = vshrl.u32 %v543, 7
        %v545 = vsub.s32 %v542, %v544
        %v546 = vrot.slane %v539, %v545
        %v548 = vmul.f32 %v523, %v546
        %550 = vrot.lane.b32.xlu0 %v548, 112
        %v551 = vpop.permute.xlu0 %550
        %v552 = vrot.slane %v551, 2
        %vm553 = vcmask 916480
        %v554 = vsel %vm553, %v551, %v552
        %v556 = vadd.f32 %v536, %v554
        %557 = vset.pattern.permute.xlu0 14
        %558 = vperm.xlu0 %557, %v522
        %v559 = vpop.permute.xlu0 %558
        %v561 = vunpack.c.l.s4 269488144
        %v562 = vunpack.c.0.s8 %v561
        %v563 = vlaneseq
        %v564 = vshrl.u32 %v563, 7
        %v565 = vsub.s32 %v562, %v564
        %v566 = vrot.slane %v559, %v565
        %v568 = vmul.f32 %v523, %v566
        %570 = vrot.lane.b32.xlu0 %v568, 96
        %v571 = vpop.permute.xlu0 %570
        %v572 = vrot.slane %v571, 2
        %vm573 = vcmask 785408
        %v574 = vsel %vm573, %v571, %v572
        %v576 = vadd.f32 %v556, %v574
        %577 = vset.pattern.permute.xlu0 21
        %578 = vperm.xlu0 %577, %v522
        %v579 = vpop.permute.xlu0 %578
        %v581 = vunpack.c.l.s4 269488144
        %v582 = vunpack.c.0.s8 %v581
        %v583 = vlaneseq
        %v584 = vshrl.u32 %v583, 7
        %v585 = vsub.s32 %v582, %v584
        %v586 = vrot.slane %v579, %v585
        %v588 = vmul.f32 %v523, %v586
        %590 = vrot.lane.b32.xlu0 %v588, 80
        %v591 = vpop.permute.xlu0 %590
        %v592 = vrot.slane %v591, 2
        %vm593 = vcmask 654336
        %v594 = vsel %vm593, %v591, %v592
        %v596 = vadd.f32 %v576, %v594
        %v597 = vld [vmem:[#allocation2 + $0x2] sm:$0x3f]
        %598 = vset.pattern.permute.xlu0 28
        %599 = vperm.xlu0 %598, %v522
        %v600 = vpop.permute.xlu0 %599
        %v602 = vunpack.c.l.s4 269488144
        %v603 = vunpack.c.0.s8 %v602
        %v604 = vlaneseq
        %v605 = vshrl.u32 %v604, 7
        %v606 = vsub.s32 %v603, %v605
        %v607 = vrot.slane %v600, %v606
        %v609 = vmul.f32 %v597, %v607
        %611 = vrot.lane.b32.xlu0 %v609, 64
        %v612 = vpop.permute.xlu0 %611
        %v613 = vrot.slane %v612, 6
        %vm614 = vcmask 523264
        %v615 = vsel %vm614, %v613, %v612
        %v617 = vadd.f32 %v596, %v615
        %618 = vset.pattern.permute.xlu0 35
        %619 = vperm.xlu0 %618, %v522
        %v620 = vpop.permute.xlu0 %619
        %v622 = vunpack.c.l.s4 269488144
        %v623 = vunpack.c.0.s8 %v622
        %v624 = vlaneseq
        %v625 = vshrl.u32 %v624, 7
        %v626 = vsub.s32 %v623, %v625
        %v627 = vrot.slane %v620, %v626
        %v629 = vmul.f32 %v597, %v627
        %631 = vrot.lane.b32.xlu0 %v629, 48
        %v632 = vpop.permute.xlu0 %631
        %v633 = vrot.slane %v632, 6
        %vm634 = vcmask 392192
        %v635 = vsel %vm634, %v633, %v632
        %v637 = vadd.f32 %v617, %v635
        %638 = vset.pattern.permute.xlu0 42
        %639 = vperm.xlu0 %638, %v522
        %v640 = vpop.permute.xlu0 %639
        %v642 = vunpack.c.l.s4 269488144
        %v643 = vunpack.c.0.s8 %v642
        %v644 = vlaneseq
        %v645 = vshrl.u32 %v644, 7
        %v646 = vsub.s32 %v643, %v645
        %v647 = vrot.slane %v640, %v646
        %v649 = vmul.f32 %v597, %v647
        %651 = vrot.lane.b32.xlu0 %v649, 32
        %v652 = vpop.permute.xlu0 %651
        %v653 = vrot.slane %v652, 6
        %vm654 = vcmask 261120
        %v655 = vsel %vm654, %v653, %v652
        %v657 = vadd.f32 %v637, %v655
        %v658 = vadd.s32 %v520, 4294967293
        %v659 = vadd.s32 %v521, 4294967293
        %vm660 = vcmp.ge.s32.totalorder %v658, 0
        %vm661 = vcmp.ge.s32.totalorder %v659, 0
        %vm662 = vcmp.lt.s32.totalorder %v658, 16
        %vm663 = vcmp.lt.s32.totalorder %v659, 16
        %vm664 = vmand %vm660, %vm662
        %vm665 = vmand %vm661, %vm663
        %v666 = vsel %vm664, 1, 0
        %v667 = vsel %vm665, 1, 0
        %vm668 = vcmp.eq.s32.totalorder %v666, 1
        %vm669 = vcmp.eq.s32.totalorder %v667, 1
        %v671 = vcombine.high %v657, %v657
        %v673 = vunpack.c.l.s4 1983009808
        %v674 = vunpack.c.0.s8 %v673
        %v675 = vlaneseq
        %v676 = vshrl.u32 %v675, 7
        %v677 = vsub.s32 %v674, %v676
        %v678 = vrot.slane %v657, %v677
        %v680 = vunpack.c.l.s4 1983009808
        %v681 = vunpack.c.0.s8 %v680
        %v682 = vlaneseq
        %v683 = vshrl.u32 %v682, 7
        %v684 = vsub.s32 %v681, %v683
        %v685 = vrot.slane %v671, %v684
        %v686 = vcombine.high %v678, %v678
        %687 = vrot.lane.b32.xlu0 %v678, 51
        %v688 = vpop.permute.xlu0 %687
        %689 = vrot.lane.b32.xlu0 %v686, 51
        %v690 = vpop.permute.xlu0 %689
        %691 = vrot.lane.b32.xlu0 %v685, 51
        %v692 = vpop.permute.xlu0 %691
        %vm693 = vcmask 416768
        %v694 = vsel %vm693, %v688, %v690
        %v695 = vsel %vm693, %v690, %v692
        %v698 = vsel %vm668, %v694, 0.0
        %v699 = vsel %vm669, %v695, 0.0
        %v700 = vld [vmem:[#allocation2] sm:$0x3f]
        %701 = vset.pattern.permute.xlu0 1
        %702 = vperm.xlu0 %701, %v522
        %v703 = vpop.permute.xlu0 %702
        %v705 = vunpack.c.l.s4 269488144
        %v706 = vunpack.c.0.s8 %v705
        %v707 = vlaneseq
        %v708 = vshrl.u32 %v707, 7
        %v709 = vsub.s32 %v706, %v708
        %v710 = vrot.slane %v703, %v709
        %v712 = vmul.f32 %v700, %v710
        %713 = vset.pattern.permute.xlu0 8
        %714 = vperm.xlu0 %713, %v522
        %v715 = vpop.permute.xlu0 %714
        %v717 = vunpack.c.l.s4 269488144
        %v718 = vunpack.c.0.s8 %v717
        %v719 = vlaneseq
        %v720 = vshrl.u32 %v719, 7
        %v721 = vsub.s32 %v718, %v720
        %v722 = vrot.slane %v715, %v721
        %v724 = vmul.f32 %v700, %v722
        %726 = vrot.lane.b32.xlu0 %v724, 112
        %v727 = vpop.permute.xlu0 %726
        %v728 = vrot.slane %v727, 2
        %v729 = vsel %vm553, %v727, %v728
        %v731 = vadd.f32 %v712, %v729
        %732 = vset.pattern.permute.xlu0 15
        %733 = vperm.xlu0 %732, %v522
        %v734 = vpop.permute.xlu0 %733
        %v736 = vunpack.c.l.s4 269488144
        %v737 = vunpack.c.0.s8 %v736
        %v738 = vlaneseq
        %v739 = vshrl.u32 %v738, 7
        %v740 = vsub.s32 %v737, %v739
        %v741 = vrot.slane %v734, %v740
        %v743 = vmul.f32 %v700, %v741
        %745 = vrot.lane.b32.xlu0 %v743, 96
        %v746 = vpop.permute.xlu0 %745
        %v747 = vrot.slane %v746, 2
        %v748 = vsel %vm573, %v746, %v747
        %v750 = vadd.f32 %v731, %v748
        %751 = vset.pattern.permute.xlu0 22
        %752 = vperm.xlu0 %751, %v522
        %v753 = vpop.permute.xlu0 %752
        %v755 = vunpack.c.l.s4 269488144
        %v756 = vunpack.c.0.s8 %v755
        %v757 = vlaneseq
        %v758 = vshrl.u32 %v757, 7
        %v759 = vsub.s32 %v756, %v758
        %v760 = vrot.slane %v753, %v759
        %v762 = vmul.f32 %v700, %v760
        %764 = vrot.lane.b32.xlu0 %v762, 80
        %v765 = vpop.permute.xlu0 %764
        %v766 = vrot.slane %v765, 2
        %v767 = vsel %vm593, %v765, %v766
        %v769 = vadd.f32 %v750, %v767
        %v770 = vld [vmem:[#allocation2 + $0x2] sm:$0x3f]
        %771 = vset.pattern.permute.xlu0 29
        %772 = vperm.xlu0 %771, %v522
        %v773 = vpop.permute.xlu0 %772
        %v775 = vunpack.c.l.s4 269488144
        %v776 = vunpack.c.0.s8 %v775
        %v777 = vlaneseq
        %v778 = vshrl.u32 %v777, 7
        %v779 = vsub.s32 %v776, %v778
        %v780 = vrot.slane %v773, %v779
        %v782 = vmul.f32 %v770, %v780
        %784 = vrot.lane.b32.xlu0 %v782, 64
        %v785 = vpop.permute.xlu0 %784
        %v786 = vrot.slane %v785, 6
        %v787 = vsel %vm614, %v786, %v785
        %v789 = vadd.f32 %v769, %v787
        %790 = vset.pattern.permute.xlu0 36
        %791 = vperm.xlu0 %790, %v522
        %v792 = vpop.permute.xlu0 %791
        %v794 = vunpack.c.l.s4 269488144
        %v795 = vunpack.c.0.s8 %v794
        %v796 = vlaneseq
        %v797 = vshrl.u32 %v796, 7
        %v798 = vsub.s32 %v795, %v797
        %v799 = vrot.slane %v792, %v798
        %v801 = vmul.f32 %v770, %v799
        %803 = vrot.lane.b32.xlu0 %v801, 48
        %v804 = vpop.permute.xlu0 %803
        %v805 = vrot.slane %v804, 6
        %v806 = vsel %vm634, %v805, %v804
        %v808 = vadd.f32 %v789, %v806
        %809 = vset.pattern.permute.xlu0 43
        %810 = vperm.xlu0 %809, %v522
        %v811 = vpop.permute.xlu0 %810
        %v813 = vunpack.c.l.s4 269488144
        %v814 = vunpack.c.0.s8 %v813
        %v815 = vlaneseq
        %v816 = vshrl.u32 %v815, 7
        %v817 = vsub.s32 %v814, %v816
        %v818 = vrot.slane %v811, %v817
        %v820 = vmul.f32 %v770, %v818
        %822 = vrot.lane.b32.xlu0 %v820, 32
        %v823 = vpop.permute.xlu0 %822
        %v824 = vrot.slane %v823, 6
        %v825 = vsel %vm654, %v824, %v823
        %v827 = vadd.f32 %v808, %v825
        %v828 = vadd.s32 %v520, 4294967294
        %v829 = vadd.s32 %v521, 4294967294
        %vm830 = vcmp.ge.s32.totalorder %v828, 0
        %vm831 = vcmp.ge.s32.totalorder %v829, 0
        %vm832 = vcmp.lt.s32.totalorder %v828, 16
        %vm833 = vcmp.lt.s32.totalorder %v829, 16
        %vm834 = vmand %vm830, %vm832
        %vm835 = vmand %vm831, %vm833
        %v836 = vsel %vm834, 1, 0
        %v837 = vsel %vm835, 1, 0
        %vm838 = vcmp.eq.s32.totalorder %v836, 1
        %vm839 = vcmp.eq.s32.totalorder %v837, 1
        %v841 = vcombine.high %v827, %v827
        %v843 = vunpack.c.l.s4 1983009808
        %v844 = vunpack.c.0.s8 %v843
        %v845 = vlaneseq
        %v846 = vshrl.u32 %v845, 7
        %v847 = vsub.s32 %v844, %v846
        %v848 = vrot.slane %v827, %v847
        %v850 = vunpack.c.l.s4 1983009808
        %v851 = vunpack.c.0.s8 %v850
        %v852 = vlaneseq
        %v853 = vshrl.u32 %v852, 7
        %v854 = vsub.s32 %v851, %v853
        %v855 = vrot.slane %v841, %v854
        %v856 = vcombine.high %v848, %v848
        %857 = vrot.lane.b32.xlu0 %v848, 50
        %v858 = vpop.permute.xlu0 %857
        %859 = vrot.lane.b32.xlu0 %v856, 50
        %v860 = vpop.permute.xlu0 %859
        %861 = vrot.lane.b32.xlu0 %v855, 50
        %v862 = vpop.permute.xlu0 %861
        %vm863 = vcmask 408576
        %v864 = vsel %vm863, %v858, %v860
        %v865 = vsel %vm863, %v860, %v862
        %v868 = vsel %vm838, %v864, 0.0
        %v869 = vsel %vm839, %v865, 0.0
        %v870 = vadd.f32 %v698, %v868
        %v871 = vadd.f32 %v699, %v869
        %v872 = vld [vmem:[#allocation2] sm:$0x3f]
        %873 = vset.pattern.permute.xlu0 2
        %874 = vperm.xlu0 %873, %v522
        %v875 = vpop.permute.xlu0 %874
        %v877 = vunpack.c.l.s4 269488144
        %v878 = vunpack.c.0.s8 %v877
        %v879 = vlaneseq
        %v880 = vshrl.u32 %v879, 7
        %v881 = vsub.s32 %v878, %v880
        %v882 = vrot.slane %v875, %v881
        %v884 = vmul.f32 %v872, %v882
        %885 = vset.pattern.permute.xlu0 9
        %886 = vperm.xlu0 %885, %v522
        %v887 = vpop.permute.xlu0 %886
        %v889 = vunpack.c.l.s4 269488144
        %v890 = vunpack.c.0.s8 %v889
        %v891 = vlaneseq
        %v892 = vshrl.u32 %v891, 7
        %v893 = vsub.s32 %v890, %v892
        %v894 = vrot.slane %v887, %v893
        %v896 = vmul.f32 %v872, %v894
        %898 = vrot.lane.b32.xlu0 %v896, 112
        %v899 = vpop.permute.xlu0 %898
        %v900 = vrot.slane %v899, 2
        %v901 = vsel %vm553, %v899, %v900
        %v903 = vadd.f32 %v884, %v901
        %904 = vset.pattern.permute.xlu0 16
        %905 = vperm.xlu0 %904, %v522
        %v906 = vpop.permute.xlu0 %905
        %v908 = vunpack.c.l.s4 269488144
        %v909 = vunpack.c.0.s8 %v908
        %v910 = vlaneseq
        %v911 = vshrl.u32 %v910, 7
        %v912 = vsub.s32 %v909, %v911
        %v913 = vrot.slane %v906, %v912
        %v915 = vmul.f32 %v872, %v913
        %917 = vrot.lane.b32.xlu0 %v915, 96
        %v918 = vpop.permute.xlu0 %917
        %v919 = vrot.slane %v918, 2
        %v920 = vsel %vm573, %v918, %v919
        %v922 = vadd.f32 %v903, %v920
        %923 = vset.pattern.permute.xlu0 23
        %924 = vperm.xlu0 %923, %v522
        %v925 = vpop.permute.xlu0 %924
        %v927 = vunpack.c.l.s4 269488144
        %v928 = vunpack.c.0.s8 %v927
        %v929 = vlaneseq
        %v930 = vshrl.u32 %v929, 7
        %v931 = vsub.s32 %v928, %v930
        %v932 = vrot.slane %v925, %v931
        %v934 = vmul.f32 %v872, %v932
        %936 = vrot.lane.b32.xlu0 %v934, 80
        %v937 = vpop.permute.xlu0 %936
        %v938 = vrot.slane %v937, 2
        %v939 = vsel %vm593, %v937, %v938
        %v941 = vadd.f32 %v922, %v939
        %v942 = vld [vmem:[#allocation2 + $0x2] sm:$0x3f]
        %943 = vset.pattern.permute.xlu0 30
        %944 = vperm.xlu0 %943, %v522
        %v945 = vpop.permute.xlu0 %944
        %v947 = vunpack.c.l.s4 269488144
        %v948 = vunpack.c.0.s8 %v947
        %v949 = vlaneseq
        %v950 = vshrl.u32 %v949, 7
        %v951 = vsub.s32 %v948, %v950
        %v952 = vrot.slane %v945, %v951
        %v954 = vmul.f32 %v942, %v952
        %956 = vrot.lane.b32.xlu0 %v954, 64
        %v957 = vpop.permute.xlu0 %956
        %v958 = vrot.slane %v957, 6
        %v959 = vsel %vm614, %v958, %v957
        %v961 = vadd.f32 %v941, %v959
        %962 = vset.pattern.permute.xlu0 37
        %963 = vperm.xlu0 %962, %v522
        %v964 = vpop.permute.xlu0 %963
        %v966 = vunpack.c.l.s4 269488144
        %v967 = vunpack.c.0.s8 %v966
        %v968 = vlaneseq
        %v969 = vshrl.u32 %v968, 7
        %v970 = vsub.s32 %v967, %v969
        %v971 = vrot.slane %v964, %v970
        %v973 = vmul.f32 %v942, %v971
        %975 = vrot.lane.b32.xlu0 %v973, 48
        %v976 = vpop.permute.xlu0 %975
        %v977 = vrot.slane %v976, 6
        %v978 = vsel %vm634, %v977, %v976
        %v980 = vadd.f32 %v961, %v978
        %981 = vset.pattern.permute.xlu0 44
        %982 = vperm.xlu0 %981, %v522
        %v983 = vpop.permute.xlu0 %982
        %v985 = vunpack.c.l.s4 269488144
        %v986 = vunpack.c.0.s8 %v985
        %v987 = vlaneseq
        %v988 = vshrl.u32 %v987, 7
        %v989 = vsub.s32 %v986, %v988
        %v990 = vrot.slane %v983, %v989
        %v992 = vmul.f32 %v942, %v990
        %994 = vrot.lane.b32.xlu0 %v992, 32
        %v995 = vpop.permute.xlu0 %994
        %v996 = vrot.slane %v995, 6
        %v997 = vsel %vm654, %v996, %v995
        %v999 = vadd.f32 %v980, %v997
        %v1000 = vadd.s32 %v520, 4294967295
        %v1001 = vadd.s32 %v521, 4294967295
        %vm1002 = vcmp.ge.s32.totalorder %v1000, 0
        %vm1003 = vcmp.ge.s32.totalorder %v1001, 0
        %vm1004 = vcmp.lt.s32.totalorder %v1000, 16
        %vm1005 = vcmp.lt.s32.totalorder %v1001, 16
        %vm1006 = vmand %vm1002, %vm1004
        %vm1007 = vmand %vm1003, %vm1005
        %v1008 = vsel %vm1006, 1, 0
        %v1009 = vsel %vm1007, 1, 0
        %vm1010 = vcmp.eq.s32.totalorder %v1008, 1
        %vm1011 = vcmp.eq.s32.totalorder %v1009, 1
        %v1013 = vcombine.high %v999, %v999
        %v1015 = vunpack.c.l.s4 1983009808
        %v1016 = vunpack.c.0.s8 %v1015
        %v1017 = vlaneseq
        %v1018 = vshrl.u32 %v1017, 7
        %v1019 = vsub.s32 %v1016, %v1018
        %v1020 = vrot.slane %v999, %v1019
        %v1022 = vunpack.c.l.s4 1983009808
        %v1023 = vunpack.c.0.s8 %v1022
        %v1024 = vlaneseq
        %v1025 = vshrl.u32 %v1024, 7
        %v1026 = vsub.s32 %v1023, %v1025
        %v1027 = vrot.slane %v1013, %v1026
        %v1028 = vcombine.high %v1020, %v1020
        %1029 = vrot.lane.b32.xlu0 %v1020, 49
        %v1030 = vpop.permute.xlu0 %1029
        %1031 = vrot.lane.b32.xlu0 %v1028, 49
        %v1032 = vpop.permute.xlu0 %1031
        %1033 = vrot.lane.b32.xlu0 %v1027, 49
        %v1034 = vpop.permute.xlu0 %1033
        %vm1035 = vcmask 400384
        %v1036 = vsel %vm1035, %v1030, %v1032
        %v1037 = vsel %vm1035, %v1032, %v1034
        %v1040 = vsel %vm1010, %v1036, 0.0
        %v1041 = vsel %vm1011, %v1037, 0.0
        %v1042 = vadd.f32 %v870, %v1040
        %v1043 = vadd.f32 %v871, %v1041
        %v1044 = vld [vmem:[#allocation2] sm:$0x3f]
        %1045 = vset.pattern.permute.xlu0 3
        %1046 = vperm.xlu0 %1045, %v522
        %v1047 = vpop.permute.xlu0 %1046
        %v1049 = vunpack.c.l.s4 269488144
        %v1050 = vunpack.c.0.s8 %v1049
        %v1051 = vlaneseq
        %v1052 = vshrl.u32 %v1051, 7
        %v1053 = vsub.s32 %v1050, %v1052
        %v1054 = vrot.slane %v1047, %v1053
        %v1056 = vmul.f32 %v1044, %v1054
        %1057 = vset.pattern.permute.xlu0 10
        %1058 = vperm.xlu0 %1057, %v522
        %v1059 = vpop.permute.xlu0 %1058
        %v1061 = vunpack.c.l.s4 269488144
        %v1062 = vunpack.c.0.s8 %v1061
        %v1063 = vlaneseq
        %v1064 = vshrl.u32 %v1063, 7
        %v1065 = vsub.s32 %v1062, %v1064
        %v1066 = vrot.slane %v1059, %v1065
        %v1068 = vmul.f32 %v1044, %v1066
        %1070 = vrot.lane.b32.xlu0 %v1068, 112
        %v1071 = vpop.permute.xlu0 %1070
        %v1072 = vrot.slane %v1071, 2
        %v1073 = vsel %vm553, %v1071, %v1072
        %v1075 = vadd.f32 %v1056, %v1073
        %1076 = vset.pattern.permute.xlu0 17
        %1077 = vperm.xlu0 %1076, %v522
        %v1078 = vpop.permute.xlu0 %1077
        %v1080 = vunpack.c.l.s4 269488144
        %v1081 = vunpack.c.0.s8 %v1080
        %v1082 = vlaneseq
        %v1083 = vshrl.u32 %v1082, 7
        %v1084 = vsub.s32 %v1081, %v1083
        %v1085 = vrot.slane %v1078, %v1084
        %v1087 = vmul.f32 %v1044, %v1085
        %1089 = vrot.lane.b32.xlu0 %v1087, 96
        %v1090 = vpop.permute.xlu0 %1089
        %v1091 = vrot.slane %v1090, 2
        %v1092 = vsel %vm573, %v1090, %v1091
        %v1094 = vadd.f32 %v1075, %v1092
        %v1095 = vld [vmem:[#allocation2 + $0x2] sm:$0xf]
        %1096 = vset.pattern.permute.xlu0 24
        %1097 = vperm.xlu0 %1096, %v522
        %v1098 = vpop.permute.xlu0 %1097
        %v1100 = vunpack.c.l.s4 269488144
        %v1101 = vunpack.c.0.s8 %v1100
        %v1102 = vlaneseq
        %v1103 = vshrl.u32 %v1102, 7
        %v1104 = vsub.s32 %v1101, %v1103
        %v1105 = vrot.slane %v1098, %v1104
        %v1107 = vmul.f32 %v1095, %v1105
        %1109 = vrot.lane.b32.xlu0 %v1107, 80
        %v1110 = vpop.permute.xlu0 %1109
        %v1111 = vrot.slane %v1110, 6
        %v1112 = vsel %vm593, %v1111, %v1110
        %v1114 = vadd.f32 %v1094, %v1112
        %v1115 = vld [vmem:[#allocation2 + $0x2] sm:$0x3f]
        %1116 = vset.pattern.permute.xlu0 31
        %1117 = vperm.xlu0 %1116, %v522
        %v1118 = vpop.permute.xlu0 %1117
        %v1120 = vunpack.c.l.s4 269488144
        %v1121 = vunpack.c.0.s8 %v1120
        %v1122 = vlaneseq
        %v1123 = vshrl.u32 %v1122, 7
        %v1124 = vsub.s32 %v1121, %v1123
        %v1125 = vrot.slane %v1118, %v1124
        %v1127 = vmul.f32 %v1115, %v1125
        %1129 = vrot.lane.b32.xlu0 %v1127, 64
        %v1130 = vpop.permute.xlu0 %1129
        %v1131 = vrot.slane %v1130, 6
        %v1132 = vsel %vm614, %v1131, %v1130
        %v1134 = vadd.f32 %v1114, %v1132
        %1135 = vset.pattern.permute.xlu0 38
        %1136 = vperm.xlu0 %1135, %v522
        %v1137 = vpop.permute.xlu0 %1136
        %v1139 = vunpack.c.l.s4 269488144
        %v1140 = vunpack.c.0.s8 %v1139
        %v1141 = vlaneseq
        %v1142 = vshrl.u32 %v1141, 7
        %v1143 = vsub.s32 %v1140, %v1142
        %v1144 = vrot.slane %v1137, %v1143
        %v1146 = vmul.f32 %v1115, %v1144
        %1148 = vrot.lane.b32.xlu0 %v1146, 48
        %v1149 = vpop.permute.xlu0 %1148
        %v1150 = vrot.slane %v1149, 6
        %v1151 = vsel %vm634, %v1150, %v1149
        %v1153 = vadd.f32 %v1134, %v1151
        %1154 = vset.pattern.permute.xlu0 45
        %1155 = vperm.xlu0 %1154, %v522
        %v1156 = vpop.permute.xlu0 %1155
        %v1158 = vunpack.c.l.s4 269488144
        %v1159 = vunpack.c.0.s8 %v1158
        %v1160 = vlaneseq
        %v1161 = vshrl.u32 %v1160, 7
        %v1162 = vsub.s32 %v1159, %v1161
        %v1163 = vrot.slane %v1156, %v1162
        %v1165 = vmul.f32 %v1115, %v1163
        %1167 = vrot.lane.b32.xlu0 %v1165, 32
        %v1168 = vpop.permute.xlu0 %1167
        %v1169 = vrot.slane %v1168, 6
        %v1170 = vsel %vm654, %v1169, %v1168
        %v1172 = vadd.f32 %v1153, %v1170
        %v1174 = vcombine.high %v1172, %v1172
        %v1176 = vunpack.c.l.s4 1983009808
        %v1177 = vunpack.c.0.s8 %v1176
        %v1178 = vlaneseq
        %v1179 = vshrl.u32 %v1178, 7
        %v1180 = vsub.s32 %v1177, %v1179
        %v1181 = vrot.slane %v1172, %v1180
        %v1183 = vunpack.c.l.s4 1983009808
        %v1184 = vunpack.c.0.s8 %v1183
        %v1185 = vlaneseq
        %v1186 = vshrl.u32 %v1185, 7
        %v1187 = vsub.s32 %v1184, %v1186
        %v1188 = vrot.slane %v1174, %v1187
        %v1189 = vcombine.high %v1181, %v1181
        %1190 = vrot.lane.b32.xlu0 %v1181, 48
        %v1191 = vpop.permute.xlu0 %1190
        %1192 = vrot.lane.b32.xlu0 %v1189, 48
        %v1193 = vpop.permute.xlu0 %1192
        %1194 = vrot.lane.b32.xlu0 %v1188, 48
        %v1195 = vpop.permute.xlu0 %1194
        %v1196 = vsel %vm634, %v1191, %v1193
        %v1197 = vsel %vm634, %v1193, %v1195
        %v1200 = vadd.f32 %v1042, %v1196
        %v1201 = vadd.f32 %v1043, %v1197
        %v1202 = vld [vmem:[#allocation2] sm:$0x3f]
        %1203 = vset.pattern.permute.xlu0 4
        %1204 = vperm.xlu0 %1203, %v522
        %v1205 = vpop.permute.xlu0 %1204
        %v1207 = vunpack.c.l.s4 269488144
        %v1208 = vunpack.c.0.s8 %v1207
        %v1209 = vlaneseq
        %v1210 = vshrl.u32 %v1209, 7
        %v1211 = vsub.s32 %v1208, %v1210
        %v1212 = vrot.slane %v1205, %v1211
        %v1214 = vmul.f32 %v1202, %v1212
        %1215 = vset.pattern.permute.xlu0 11
        %1216 = vperm.xlu0 %1215, %v522
        %v1217 = vpop.permute.xlu0 %1216
        %v1219 = vunpack.c.l.s4 269488144
        %v1220 = vunpack.c.0.s8 %v1219
        %v1221 = vlaneseq
        %v1222 = vshrl.u32 %v1221, 7
        %v1223 = vsub.s32 %v1220, %v1222
        %v1224 = vrot.slane %v1217, %v1223
        %v1226 = vmul.f32 %v1202, %v1224
        %1228 = vrot.lane.b32.xlu0 %v1226, 112
        %v1229 = vpop.permute.xlu0 %1228
        %v1230 = vrot.slane %v1229, 2
        %v1231 = vsel %vm553, %v1229, %v1230
        %v1233 = vadd.f32 %v1214, %v1231
        %1234 = vset.pattern.permute.xlu0 18
        %1235 = vperm.xlu0 %1234, %v522
        %v1236 = vpop.permute.xlu0 %1235
        %v1238 = vunpack.c.l.s4 269488144
        %v1239 = vunpack.c.0.s8 %v1238
        %v1240 = vlaneseq
        %v1241 = vshrl.u32 %v1240, 7
        %v1242 = vsub.s32 %v1239, %v1241
        %v1243 = vrot.slane %v1236, %v1242
        %v1245 = vmul.f32 %v1202, %v1243
        %1247 = vrot.lane.b32.xlu0 %v1245, 96
        %v1248 = vpop.permute.xlu0 %1247
        %v1249 = vrot.slane %v1248, 2
        %v1250 = vsel %vm573, %v1248, %v1249
        %v1252 = vadd.f32 %v1233, %v1250
        %v1253 = vld [vmem:[#allocation2 + $0x2] sm:$0x3f]
        %1254 = vset.pattern.permute.xlu0 25
        %1255 = vperm.xlu0 %1254, %v522
        %v1256 = vpop.permute.xlu0 %1255
        %v1258 = vunpack.c.l.s4 269488144
        %v1259 = vunpack.c.0.s8 %v1258
        %v1260 = vlaneseq
        %v1261 = vshrl.u32 %v1260, 7
        %v1262 = vsub.s32 %v1259, %v1261
        %v1263 = vrot.slane %v1256, %v1262
        %v1265 = vmul.f32 %v1253, %v1263
        %1267 = vrot.lane.b32.xlu0 %v1265, 80
        %v1268 = vpop.permute.xlu0 %1267
        %v1269 = vrot.slane %v1268, 6
        %v1270 = vsel %vm593, %v1269, %v1268
        %v1272 = vadd.f32 %v1252, %v1270
        %1273 = vset.pattern.permute.xlu0 32
        %1274 = vperm.xlu0 %1273, %v522
        %v1275 = vpop.permute.xlu0 %1274
        %v1277 = vunpack.c.l.s4 269488144
        %v1278 = vunpack.c.0.s8 %v1277
        %v1279 = vlaneseq
        %v1280 = vshrl.u32 %v1279, 7
        %v1281 = vsub.s32 %v1278, %v1280
        %v1282 = vrot.slane %v1275, %v1281
        %v1284 = vmul.f32 %v1253, %v1282
        %1286 = vrot.lane.b32.xlu0 %v1284, 64
        %v1287 = vpop.permute.xlu0 %1286
        %v1288 = vrot.slane %v1287, 6
        %v1289 = vsel %vm614, %v1288, %v1287
        %v1291 = vadd.f32 %v1272, %v1289
        %1292 = vset.pattern.permute.xlu0 39
        %1293 = vperm.xlu0 %1292, %v522
        %v1294 = vpop.permute.xlu0 %1293
        %v1296 = vunpack.c.l.s4 269488144
        %v1297 = vunpack.c.0.s8 %v1296
        %v1298 = vlaneseq
        %v1299 = vshrl.u32 %v1298, 7
        %v1300 = vsub.s32 %v1297, %v1299
        %v1301 = vrot.slane %v1294, %v1300
        %v1303 = vmul.f32 %v1253, %v1301
        %1305 = vrot.lane.b32.xlu0 %v1303, 48
        %v1306 = vpop.permute.xlu0 %1305
        %v1307 = vrot.slane %v1306, 6
        %v1308 = vsel %vm634, %v1307, %v1306
        %v1310 = vadd.f32 %v1291, %v1308
        %1311 = vset.pattern.permute.xlu0 46
        %1312 = vperm.xlu0 %1311, %v522
        %v1313 = vpop.permute.xlu0 %1312
        %v1315 = vunpack.c.l.s4 269488144
        %v1316 = vunpack.c.0.s8 %v1315
        %v1317 = vlaneseq
        %v1318 = vshrl.u32 %v1317, 7
        %v1319 = vsub.s32 %v1316, %v1318
        %v1320 = vrot.slane %v1313, %v1319
        %v1322 = vmul.f32 %v1253, %v1320
        %1324 = vrot.lane.b32.xlu0 %v1322, 32
        %v1325 = vpop.permute.xlu0 %1324
        %v1326 = vrot.slane %v1325, 6
        %v1327 = vsel %vm654, %v1326, %v1325
        %v1329 = vadd.f32 %v1310, %v1327
        %v1330 = vadd.s32 %v520, 1
        %v1331 = vadd.s32 %v521, 1
        %vm1332 = vcmp.ge.s32.totalorder %v1330, 0
        %vm1333 = vcmp.ge.s32.totalorder %v1331, 0
        %vm1334 = vcmp.lt.s32.totalorder %v1330, 16
        %vm1335 = vcmp.lt.s32.totalorder %v1331, 16
        %vm1336 = vmand %vm1332, %vm1334
        %vm1337 = vmand %vm1333, %vm1335
        %v1338 = vsel %vm1336, 1, 0
        %v1339 = vsel %vm1337, 1, 0
        %vm1340 = vcmp.eq.s32.totalorder %v1338, 1
        %vm1341 = vcmp.eq.s32.totalorder %v1339, 1
        %v1343 = vcombine.high %v1329, %v1329
        %v1345 = vunpack.c.l.s4 1983009808
        %v1346 = vunpack.c.0.s8 %v1345
        %v1347 = vlaneseq
        %v1348 = vshrl.u32 %v1347, 7
        %v1349 = vsub.s32 %v1346, %v1348
        %v1350 = vrot.slane %v1329, %v1349
        %v1352 = vunpack.c.l.s4 1983009808
        %v1353 = vunpack.c.0.s8 %v1352
        %v1354 = vlaneseq
        %v1355 = vshrl.u32 %v1354, 7
        %v1356 = vsub.s32 %v1353, %v1355
        %v1357 = vrot.slane %v1343, %v1356
        %v1358 = vcombine.high %v1350, %v1350
        %1359 = vrot.lane.b32.xlu0 %v1350, 47
        %v1360 = vpop.permute.xlu0 %1359
        %1361 = vrot.lane.b32.xlu0 %v1358, 47
        %v1362 = vpop.permute.xlu0 %1361
        %1363 = vrot.lane.b32.xlu0 %v1357, 47
        %v1364 = vpop.permute.xlu0 %1363
        %vm1365 = vcmask 384000
        %v1366 = vsel %vm1365, %v1360, %v1362
        %v1367 = vsel %vm1365, %v1362, %v1364
        %v1370 = vsel %vm1340, %v1366, 0.0
        %v1371 = vsel %vm1341, %v1367, 0.0
        %v1372 = vadd.f32 %v1200, %v1370
        %v1373 = vadd.f32 %v1201, %v1371
        %v1374 = vld [vmem:[#allocation2] sm:$0x3f]
        %1375 = vset.pattern.permute.xlu0 5
        %1376 = vperm.xlu0 %1375, %v522
        %v1377 = vpop.permute.xlu0 %1376
        %v1379 = vunpack.c.l.s4 269488144
        %v1380 = vunpack.c.0.s8 %v1379
        %v1381 = vlaneseq
        %v1382 = vshrl.u32 %v1381, 7
        %v1383 = vsub.s32 %v1380, %v1382
        %v1384 = vrot.slane %v1377, %v1383
        %v1386 = vmul.f32 %v1374, %v1384
        %1387 = vset.pattern.permute.xlu0 12
        %1388 = vperm.xlu0 %1387, %v522
        %v1389 = vpop.permute.xlu0 %1388
        %v1391 = vunpack.c.l.s4 269488144
        %v1392 = vunpack.c.0.s8 %v1391
        %v1393 = vlaneseq
        %v1394 = vshrl.u32 %v1393, 7
        %v1395 = vsub.s32 %v1392, %v1394
        %v1396 = vrot.slane %v1389, %v1395
        %v1398 = vmul.f32 %v1374, %v1396
        %1400 = vrot.lane.b32.xlu0 %v1398, 112
        %v1401 = vpop.permute.xlu0 %1400
        %v1402 = vrot.slane %v1401, 2
        %v1403 = vsel %vm553, %v1401, %v1402
        %v1405 = vadd.f32 %v1386, %v1403
        %1406 = vset.pattern.permute.xlu0 19
        %1407 = vperm.xlu0 %1406, %v522
        %v1408 = vpop.permute.xlu0 %1407
        %v1410 = vunpack.c.l.s4 269488144
        %v1411 = vunpack.c.0.s8 %v1410
        %v1412 = vlaneseq
        %v1413 = vshrl.u32 %v1412, 7
        %v1414 = vsub.s32 %v1411, %v1413
        %v1415 = vrot.slane %v1408, %v1414
        %v1417 = vmul.f32 %v1374, %v1415
        %1419 = vrot.lane.b32.xlu0 %v1417, 96
        %v1420 = vpop.permute.xlu0 %1419
        %v1421 = vrot.slane %v1420, 2
        %v1422 = vsel %vm573, %v1420, %v1421
        %v1424 = vadd.f32 %v1405, %v1422
        %v1425 = vld [vmem:[#allocation2 + $0x2] sm:$0x3f]
        %1426 = vset.pattern.permute.xlu0 26
        %1427 = vperm.xlu0 %1426, %v522
        %v1428 = vpop.permute.xlu0 %1427
        %v1430 = vunpack.c.l.s4 269488144
        %v1431 = vunpack.c.0.s8 %v1430
        %v1432 = vlaneseq
        %v1433 = vshrl.u32 %v1432, 7
        %v1434 = vsub.s32 %v1431, %v1433
        %v1435 = vrot.slane %v1428, %v1434
        %v1437 = vmul.f32 %v1425, %v1435
        %1439 = vrot.lane.b32.xlu0 %v1437, 80
        %v1440 = vpop.permute.xlu0 %1439
        %v1441 = vrot.slane %v1440, 6
        %v1442 = vsel %vm593, %v1441, %v1440
        %v1444 = vadd.f32 %v1424, %v1442
        %1445 = vset.pattern.permute.xlu0 33
        %1446 = vperm.xlu0 %1445, %v522
        %v1447 = vpop.permute.xlu0 %1446
        %v1449 = vunpack.c.l.s4 269488144
        %v1450 = vunpack.c.0.s8 %v1449
        %v1451 = vlaneseq
        %v1452 = vshrl.u32 %v1451, 7
        %v1453 = vsub.s32 %v1450, %v1452
        %v1454 = vrot.slane %v1447, %v1453
        %v1456 = vmul.f32 %v1425, %v1454
        %1458 = vrot.lane.b32.xlu0 %v1456, 64
        %v1459 = vpop.permute.xlu0 %1458
        %v1460 = vrot.slane %v1459, 6
        %v1461 = vsel %vm614, %v1460, %v1459
        %v1463 = vadd.f32 %v1444, %v1461
        %1464 = vset.pattern.permute.xlu0 40
        %1465 = vperm.xlu0 %1464, %v522
        %v1466 = vpop.permute.xlu0 %1465
        %v1468 = vunpack.c.l.s4 269488144
        %v1469 = vunpack.c.0.s8 %v1468
        %v1470 = vlaneseq
        %v1471 = vshrl.u32 %v1470, 7
        %v1472 = vsub.s32 %v1469, %v1471
        %v1473 = vrot.slane %v1466, %v1472
        %v1475 = vmul.f32 %v1425, %v1473
        %1477 = vrot.lane.b32.xlu0 %v1475, 48
        %v1478 = vpop.permute.xlu0 %1477
        %v1479 = vrot.slane %v1478, 6
        %v1480 = vsel %vm634, %v1479, %v1478
        %v1482 = vadd.f32 %v1463, %v1480
        %1483 = vset.pattern.permute.xlu0 47
        %1484 = vperm.xlu0 %1483, %v522
        %v1485 = vpop.permute.xlu0 %1484
        %v1487 = vunpack.c.l.s4 269488144
        %v1488 = vunpack.c.0.s8 %v1487
        %v1489 = vlaneseq
        %v1490 = vshrl.u32 %v1489, 7
        %v1491 = vsub.s32 %v1488, %v1490
        %v1492 = vrot.slane %v1485, %v1491
        %v1494 = vmul.f32 %v1425, %v1492
        %1496 = vrot.lane.b32.xlu0 %v1494, 32
        %v1497 = vpop.permute.xlu0 %1496
        %v1498 = vrot.slane %v1497, 6
        %v1499 = vsel %vm654, %v1498, %v1497
        %v1501 = vadd.f32 %v1482, %v1499
        %v1502 = vadd.s32 %v520, 2
        %v1503 = vadd.s32 %v521, 2
        %vm1504 = vcmp.ge.s32.totalorder %v1502, 0
        %vm1505 = vcmp.ge.s32.totalorder %v1503, 0
        %vm1506 = vcmp.lt.s32.totalorder %v1502, 16
        %vm1507 = vcmp.lt.s32.totalorder %v1503, 16
        %vm1508 = vmand %vm1504, %vm1506
        %vm1509 = vmand %vm1505, %vm1507
        %v1510 = vsel %vm1508, 1, 0
        %v1511 = vsel %vm1509, 1, 0
        %vm1512 = vcmp.eq.s32.totalorder %v1510, 1
        %vm1513 = vcmp.eq.s32.totalorder %v1511, 1
        %v1515 = vcombine.high %v1501, %v1501
        %v1517 = vunpack.c.l.s4 1983009808
        %v1518 = vunpack.c.0.s8 %v1517
        %v1519 = vlaneseq
        %v1520 = vshrl.u32 %v1519, 7
        %v1521 = vsub.s32 %v1518, %v1520
        %v1522 = vrot.slane %v1501, %v1521
        %v1524 = vunpack.c.l.s4 1983009808
        %v1525 = vunpack.c.0.s8 %v1524
        %v1526 = vlaneseq
        %v1527 = vshrl.u32 %v1526, 7
        %v1528 = vsub.s32 %v1525, %v1527
        %v1529 = vrot.slane %v1515, %v1528
        %v1530 = vcombine.high %v1522, %v1522
        %1531 = vrot.lane.b32.xlu0 %v1522, 46
        %v1532 = vpop.permute.xlu0 %1531
        %1533 = vrot.lane.b32.xlu0 %v1530, 46
        %v1534 = vpop.permute.xlu0 %1533
        %1535 = vrot.lane.b32.xlu0 %v1529, 46
        %v1536 = vpop.permute.xlu0 %1535
        %vm1537 = vcmask 375808
        %v1538 = vsel %vm1537, %v1532, %v1534
        %v1539 = vsel %vm1537, %v1534, %v1536
        %v1542 = vsel %vm1512, %v1538, 0.0
        %v1543 = vsel %vm1513, %v1539, 0.0
        %v1544 = vadd.f32 %v1372, %v1542
        %v1545 = vadd.f32 %v1373, %v1543
        %v1546 = vld [vmem:[#allocation2] sm:$0x3f]
        %1547 = vset.pattern.permute.xlu0 6
        %1548 = vperm.xlu0 %1547, %v522
        %v1549 = vpop.permute.xlu0 %1548
        %v1551 = vunpack.c.l.s4 269488144
        %v1552 = vunpack.c.0.s8 %v1551
        %v1553 = vlaneseq
        %v1554 = vshrl.u32 %v1553, 7
        %v1555 = vsub.s32 %v1552, %v1554
        %v1556 = vrot.slane %v1549, %v1555
        %v1558 = vmul.f32 %v1546, %v1556
        %1559 = vset.pattern.permute.xlu0 13
        %1560 = vperm.xlu0 %1559, %v522
        %v1561 = vpop.permute.xlu0 %1560
        %v1563 = vunpack.c.l.s4 269488144
        %v1564 = vunpack.c.0.s8 %v1563
        %v1565 = vlaneseq
        %v1566 = vshrl.u32 %v1565, 7
        %v1567 = vsub.s32 %v1564, %v1566
        %v1568 = vrot.slane %v1561, %v1567
        %v1570 = vmul.f32 %v1546, %v1568
        %1572 = vrot.lane.b32.xlu0 %v1570, 112
        %v1573 = vpop.permute.xlu0 %1572
        %v1574 = vrot.slane %v1573, 2
        %v1575 = vsel %vm553, %v1573, %v1574
        %v1577 = vadd.f32 %v1558, %v1575
        %1578 = vset.pattern.permute.xlu0 20
        %1579 = vperm.xlu0 %1578, %v522
        %v1580 = vpop.permute.xlu0 %1579
        %v1582 = vunpack.c.l.s4 269488144
        %v1583 = vunpack.c.0.s8 %v1582
        %v1584 = vlaneseq
        %v1585 = vshrl.u32 %v1584, 7
        %v1586 = vsub.s32 %v1583, %v1585
        %v1587 = vrot.slane %v1580, %v1586
        %v1589 = vmul.f32 %v1546, %v1587
        %1591 = vrot.lane.b32.xlu0 %v1589, 96
        %v1592 = vpop.permute.xlu0 %1591
        %v1593 = vrot.slane %v1592, 2
        %v1594 = vsel %vm573, %v1592, %v1593
        %v1596 = vadd.f32 %v1577, %v1594
        %v1597 = vld [vmem:[#allocation2 + $0x2] sm:$0x3f]
        %1598 = vset.pattern.permute.xlu0 27
        %1599 = vperm.xlu0 %1598, %v522
        %v1600 = vpop.permute.xlu0 %1599
        %v1602 = vunpack.c.l.s4 269488144
        %v1603 = vunpack.c.0.s8 %v1602
        %v1604 = vlaneseq
        %v1605 = vshrl.u32 %v1604, 7
        %v1606 = vsub.s32 %v1603, %v1605
        %v1607 = vrot.slane %v1600, %v1606
        %v1609 = vmul.f32 %v1597, %v1607
        %1611 = vrot.lane.b32.xlu0 %v1609, 80
        %v1612 = vpop.permute.xlu0 %1611
        %v1613 = vrot.slane %v1612, 6
        %v1614 = vsel %vm593, %v1613, %v1612
        %v1616 = vadd.f32 %v1596, %v1614
        %1617 = vset.pattern.permute.xlu0 34
        %1618 = vperm.xlu0 %1617, %v522
        %v1619 = vpop.permute.xlu0 %1618
        %v1621 = vunpack.c.l.s4 269488144
        %v1622 = vunpack.c.0.s8 %v1621
        %v1623 = vlaneseq
        %v1624 = vshrl.u32 %v1623, 7
        %v1625 = vsub.s32 %v1622, %v1624
        %v1626 = vrot.slane %v1619, %v1625
        %v1628 = vmul.f32 %v1597, %v1626
        %1630 = vrot.lane.b32.xlu0 %v1628, 64
        %v1631 = vpop.permute.xlu0 %1630
        %v1632 = vrot.slane %v1631, 6
        %v1633 = vsel %vm614, %v1632, %v1631
        %v1635 = vadd.f32 %v1616, %v1633
        %1636 = vset.pattern.permute.xlu0 41
        %1637 = vperm.xlu0 %1636, %v522
        %v1638 = vpop.permute.xlu0 %1637
        %v1640 = vunpack.c.l.s4 269488144
        %v1641 = vunpack.c.0.s8 %v1640
        %v1642 = vlaneseq
        %v1643 = vshrl.u32 %v1642, 7
        %v1644 = vsub.s32 %v1641, %v1643
        %v1645 = vrot.slane %v1638, %v1644
        %v1647 = vmul.f32 %v1597, %v1645
        %1649 = vrot.lane.b32.xlu0 %v1647, 48
        %v1650 = vpop.permute.xlu0 %1649
        %v1651 = vrot.slane %v1650, 6
        %v1652 = vsel %vm634, %v1651, %v1650
        %v1654 = vadd.f32 %v1635, %v1652
        %1655 = vset.pattern.permute.xlu0 48
        %1656 = vperm.xlu0 %1655, %v522
        %v1657 = vpop.permute.xlu0 %1656
        %v1659 = vunpack.c.l.s4 269488144
        %v1660 = vunpack.c.0.s8 %v1659
        %v1661 = vlaneseq
        %v1662 = vshrl.u32 %v1661, 7
        %v1663 = vsub.s32 %v1660, %v1662
        %v1664 = vrot.slane %v1657, %v1663
        %v1666 = vmul.f32 %v1597, %v1664
        %1668 = vrot.lane.b32.xlu0 %v1666, 32
        %v1669 = vpop.permute.xlu0 %1668
        %v1670 = vrot.slane %v1669, 6
        %v1671 = vsel %vm654, %v1670, %v1669
        %v1673 = vadd.f32 %v1654, %v1671
        %v1674 = vadd.s32 %v520, 3
        %v1675 = vadd.s32 %v521, 3
        %vm1676 = vcmp.ge.s32.totalorder %v1674, 0
        %vm1677 = vcmp.ge.s32.totalorder %v1675, 0
        %vm1678 = vcmp.lt.s32.totalorder %v1674, 16
        %vm1679 = vcmp.lt.s32.totalorder %v1675, 16
        %vm1680 = vmand %vm1676, %vm1678
        %vm1681 = vmand %vm1677, %vm1679
        %v1682 = vsel %vm1680, 1, 0
        %v1683 = vsel %vm1681, 1, 0
        %vm1684 = vcmp.eq.s32.totalorder %v1682, 1
        %vm1685 = vcmp.eq.s32.totalorder %v1683, 1
        %v1687 = vcombine.high %v1673, %v1673
        %v1689 = vunpack.c.l.s4 1983009808
        %v1690 = vunpack.c.0.s8 %v1689
        %v1691 = vlaneseq
        %v1692 = vshrl.u32 %v1691, 7
        %v1693 = vsub.s32 %v1690, %v1692
        %v1694 = vrot.slane %v1673, %v1693
        %v1696 = vunpack.c.l.s4 1983009808
        %v1697 = vunpack.c.0.s8 %v1696
        %v1698 = vlaneseq
        %v1699 = vshrl.u32 %v1698, 7
        %v1700 = vsub.s32 %v1697, %v1699
        %v1701 = vrot.slane %v1687, %v1700
        %v1702 = vcombine.high %v1694, %v1694
        %1703 = vrot.lane.b32.xlu0 %v1694, 45
        %v1704 = vpop.permute.xlu0 %1703
        %1705 = vrot.lane.b32.xlu0 %v1702, 45
        %v1706 = vpop.permute.xlu0 %1705
        %1707 = vrot.lane.b32.xlu0 %v1701, 45
        %v1708 = vpop.permute.xlu0 %1707
        %vm1709 = vcmask 367616
        %v1710 = vsel %vm1709, %v1704, %v1706
        %v1711 = vsel %vm1709, %v1706, %v1708
        %v1714 = vsel %vm1684, %v1710, 0.0
        %v1715 = vsel %vm1685, %v1711, 0.0
        %v1716 = vadd.f32 %v1544, %v1714
        %v1717 = vadd.f32 %v1545, %v1715
        %v1720 = vrot.slane %v1716, 1
        %v1721 = vrot.slane %v1717, 1
        %v1724 = vadd.f32 %v1716, %v1720
        %v1725 = vadd.f32 %v1717, %v1721
        %v1726 = vxor.u32 %v1724, 2147483648
        %v1727 = vxor.u32 %v1725, 2147483648
        %v1728 = vmul.f32 %v1726, 1.442695
        %v1729 = vpow.pop %v1728
        %v1730 = vmul.f32 %v1727, 1.442695
        %v1731 = vpow.pop %v1730
        %v1732 = vadd.f32 %v1729, 1.0
        %v1733 = vadd.f32 %v1731, 1.0
        %v1734 = vrcp.pop %v1732
        %v1735 = vmul.f32 1.0, %v1734
        %v1736 = vrcp.pop %v1733
        %v1737 = vmul.f32 1.0, %v1736
        %v1738 = vld [vmem:[%s191] sm:$0xff]
        %v1739 = vld [vmem:[%s191 + $0x8] sm:$0xff]
        %v1740 = vld [vmem:[%s191 + $0x10] sm:$0xff]
        %v1741 = vld [vmem:[%s191 + $0x18] sm:$0xff]
        %v1742 = vmul.f32 %v1738, %v432
        %v1743 = vmul.f32 %v1739, %v432
        %v1744 = vmul.f32 %v1740, %v437
        %v1745 = vmul.f32 %v1741, %v437
        %v1746 = vlaneseq
        %v1747 = vshrl.u32 %v1746, 7
        %v1748 = vsub.s32 0, %v1747
        %v1749 = vrot.slane %v1735, %v1748
        %v1750 = vlaneseq
        %v1751 = vshrl.u32 %v1750, 7
        %v1752 = vsub.s32 0, %v1751
        %v1753 = vrot.slane %v1737, %v1752
        %v1754 = vmul.f32 %v1742, %v1749
        %v1755 = vmul.f32 %v1743, %v1753
        %v1756 = vmul.f32 %v1744, %v1749
        %v1757 = vmul.f32 %v1745, %v1753
        %1758 = vst [vmem:[%s215] sm:$0xff] %v1754
        %1759 = vst [vmem:[%s215 + $0x8] sm:$0xff] %v1755
        %1760 = vst [vmem:[%s215 + $0x10] sm:$0xff] %v1756
        %1761 = vst [vmem:[%s215 + $0x18] sm:$0xff] %v1757
        %s1762 = sand.u32 %s118, 1
        %s1763 = scalar_lea.sflag [#allocation5], %s1762
        %s1764 = sand.u32 %s118, 1
        %s1765 = smul.addr %s1764, 32
        %s1766 = scalar_lea.vmem [#allocation6], %s1765
        // Predicated region
        $region41: #{tpu_custom_call.1} parent=35 // pred_check
          %p1767 = pneg %p128
        $region42: #{tpu_custom_call.1} parent=35 // pred_check_branch
          %1769 = sbr.rel (%p1767) target = $region44
        $region43: #{tpu_custom_call.1} parent=35 // pred_region
          %s1771 = ssub.s32 512, 512
          %1772 = vsyncadd %s1763, %s1771
          %s1773 = smul.addr %s21, 4
          %s1774 = smul.addr %s1773, 128
          %s1775 = scalar_lea.hbm %s4, %s1774
          %s1776 = sshll.u32 %s1766, 4
          %s1777 = int_to_ptr.vmem [resolvable:$true] %s1776
          %1782 = dma.vmem_to_hbm [thread:$0]  %s1777, 512, %s1775, %s1763, 256, 256, 16
        $region44: #{tpu_custom_call.1} parent=35 // pred_fallthru
          _
      $region36: #{tpu_custom_call.1} parent=5 // pred_fallthru
        _
      %p1783 = scmp.le.s32.totalorder 2, %s16
      // Predicated region
      $region45: #{tpu_custom_call.1} parent=5 // pred_check
        %p1784 = pneg %p1783
      $region46: #{tpu_custom_call.1} parent=5 // pred_check_branch
        %1786 = sbr.rel (%p1784) target = $region48
      $region47: #{tpu_custom_call.1} parent=5 // pred_region
        %s1787 = ssub.s32 %s16, 2
        // Predicated region
        $region49: #{tpu_custom_call.1} parent=47 // pred_check
          %p1788 = pneg %p134
        $region50: #{tpu_custom_call.1} parent=47 // pred_check_branch
          %1790 = sbr.rel (%p1788) target = $region52
        $region51: #{tpu_custom_call.1} parent=47 // pred_region
          %s1791 = sand.u32 %s119, 1
          %s1792 = scalar_lea.sflag [#allocation5], %s1791
          %s1793 = sand.u32 %s119, 1
          %s1794 = smul.addr %s1793, 32
          %s1795 = scalar_lea.vmem [#allocation6], %s1794
          %1796 = dma.done %s1792, 512
        $region52: #{tpu_custom_call.1} parent=47 // pred_fallthru
          _
      $region48: #{tpu_custom_call.1} parent=5 // pred_fallthru
        _
    $region6: #{tpu_custom_call.1} parent=1 // loop_footer
      %s20 = sadd.s32 1, %s16
    $region7: #{tpu_custom_call.1} parent=1 // loop_footer_branch
      %15 = sbr.rel target = $region3
    $region8: #{tpu_custom_call.1} parent=1 // loop_exit
      _
    %1797 = vsyncpa [#allocation4], 1
    %s1798 = scalar_lea.sflag [#allocation4], 1
    %1799 = vsyncpa %s1798, 1
    %1800 = vsyncpa [#allocation5], 1
    %s1801 = scalar_lea.sflag [#allocation5], 1
    %1802 = vsyncpa %s1801, 1

</llo_original>
